<compile_context>
chip_gen: v5e
topology: v5e:2x2
jax: 0.10.0
libtpu: 0.0.40
codegen_flags: <defaults>
</compile_context>

<pallas_src>
import numpy as np
import jax
import jax.numpy as jnp
from jax.experimental import pallas as pl
from jax.experimental.pallas import tpu as pltpu


def _round_up(x, m):
    return ((x + m - 1) // m) * m


# --------------------------------------------------------------------------- kernel
def _rep_kernel(x_ref, lens_ref, wih_ref, whh_ref, postw_ref, postb_ref, out_ref):
    B, HP = lens_ref.shape                      # (b_pad, 128)
    T = x_ref.shape[0] // B
    GP = whh_ref.shape[1]                       # 4 * HP

    # ---- hoisted input projection (LSTM biases ride on the ones column) -----------
    xg = jnp.dot(x_ref[...], wih_ref[...],
                 preferred_element_type=jnp.float32).reshape(T, B, GP)

    whh = whh_ref[...]                          # (HP, 4HP) bf16, block-diagonal

    # ---- fused serial recurrence: all three LSTMs advance in ONE matmul per step ---
    h = jnp.zeros((B, HP), jnp.float32)
    c = jnp.zeros((B, HP), jnp.float32)
    hs_steps = []
    for t in range(T):                          # T static & tiny -> full unroll
        gates = xg[t] + jnp.dot(h.astype(jnp.bfloat16), whh,
                                preferred_element_type=jnp.float32)
        sig = jax.nn.sigmoid(gates[:, :3 * HP])             # [i | f | o], aligned
        i_g = sig[:, 0 * HP:1 * HP]
        f_g = sig[:, 1 * HP:2 * HP]
        o_g = sig[:, 2 * HP:3 * HP]
        g_g = jnp.tanh(gates[:, 3 * HP:])
        c = f_g * c + i_g * g_g
        h = o_g * jnp.tanh(c)
        hs_steps.append(h)
    hs = jnp.stack(hs_steps, axis=0)            # (T, B, HP); no VMEM scratch

    # ---- pad_packed_sequence: zero hidden states for t >= len[b] (per branch) ------
    t_idx = jax.lax.broadcasted_iota(jnp.int32, (T, B, HP), 0)
    mask = (t_idx < lens_ref[...][None, :, :]).astype(jnp.float32)
    hs_m = hs * mask

    # ---- AttentionNet for all branches at once (block-diagonal weights) ------------
    h_flat = hs_m.reshape(T * B, HP).astype(jnp.bfloat16)
    a1 = jnp.maximum(jnp.dot(h_flat, postw_ref[:, 0 * HP:1 * HP],
                             preferred_element_type=jnp.float32)
                     + postb_ref[:, 0 * HP:1 * HP], 0.0)
    a2 = jnp.maximum(jnp.dot(a1.astype(jnp.bfloat16), postw_ref[:, 1 * HP:2 * HP],
                             preferred_element_type=jnp.float32)
                     + postb_ref[:, 1 * HP:2 * HP], 0.0)
    # score layer pre-expanded across each branch's hidden lanes (A3 ⊗ 1), so the
    # time-softmax below directly gives per-hidden-lane attention weights.
    scores = (jnp.dot(a2.astype(jnp.bfloat16), postw_ref[:, 2 * HP:3 * HP],
                      preferred_element_type=jnp.float32)
              + postb_ref[:, 2 * HP:3 * HP]).reshape(T, B, HP)
    m = jnp.max(scores, axis=0, keepdims=True)
    e = jnp.exp(scores - m)
    att = e * pl.reciprocal(jnp.sum(e, axis=0, keepdims=True), approx=True)
    sum_h = jnp.sum(att * hs_m, axis=0)         # (B, HP)

    # ---- MLPs to the common space (block-diagonal; lane-dense 128-aligned output) --
    e1 = jnp.maximum(jnp.dot(sum_h.astype(jnp.bfloat16), postw_ref[:, 3 * HP:4 * HP],
                             preferred_element_type=jnp.float32)
                     + postb_ref[:, 3 * HP:4 * HP], 0.0)
    e2 = jnp.maximum(jnp.dot(e1.astype(jnp.bfloat16), postw_ref[:, 4 * HP:5 * HP],
                             preferred_element_type=jnp.float32)
                     + postb_ref[:, 4 * HP:5 * HP], 0.0)
    out_ref[...] = (jnp.dot(e2.astype(jnp.bfloat16), postw_ref[:, 5 * HP:],
                            preferred_element_type=jnp.float32)
                    + postb_ref[:, 5 * HP:])


# -------------------------------------------------------- parameter packing (once)
def _pack_representation_params(p_img, p_aud, p_txt, common_size):
    """Block-diagonal packing of the three branches into 4 device buffers."""
    ps = (p_img, p_aud, p_txt)
    Hs = [int(p["w_hh"].shape[0]) for p in ps]
    Ds = [int(p["w_ih"].shape[0]) for p in ps]
    HP = 128
    assert sum(Hs) <= HP, "total hidden size must fit in 128 lanes"
    h_off = [0, Hs[0], Hs[0] + Hs[1]]
    d_off = [0, Ds[0], Ds[0] + Ds[1]]
    DS = sum(Ds)
    a1s = [H // 2 for H in Hs]
    a2s = [H // 4 for H in Hs]
    a1_off = [0, a1s[0], a1s[0] + a1s[1]]
    a2_off = [0, a2s[0], a2s[0] + a2s[1]]
    assert sum(a1s) <= HP and sum(a2s) <= HP
    C = int(common_size)
    CP = _round_up(C, 128)
    GP = 4 * HP

    wih = np.zeros((DS + 1, GP), np.float32)     # last row = combined LSTM bias
    whh = np.zeros((HP, GP), np.float32)
    postw = np.zeros((HP, 5 * HP + 3 * CP), np.float32)
    postb = np.zeros((1, 5 * HP + 3 * CP), np.float32)

    for k, p in enumerate(ps):
        H, D = Hs[k], Ds[k]
        ho, do_, a1o, a2o = h_off[k], d_off[k], a1_off[k], a2_off[k]
        w_ih = np.asarray(p["w_ih"], np.float32)
        w_hh = np.asarray(p["w_hh"], np.float32)
        b = np.asarray(p["b"], np.float32)
        for g in range(4):                       # packed gate order [i, f, o, g]
            cs = g * HP + ho
            wih[do_:do_ + D, cs:cs + H] = w_ih[:, g * H:(g + 1) * H]
            wih[DS, cs:cs + H] = b[0, g * H:(g + 1) * H]
            whh[ho:ho + H, cs:cs + H] = w_hh[:, g * H:(g + 1) * H]
        # AttentionNet: H -> H/2 -> H/4 -> 1 (score expanded over hidden lanes)
        postw[ho:ho + H, 0 * HP + a1o:0 * HP + a1o + H // 2] = np.asarray(p["a1"])
        postb[0, 0 * HP + a1o:0 * HP + a1o + H // 2] = np.asarray(p["ab1"])[0]
        postw[a1o:a1o + H // 2, 1 * HP + a2o:1 * HP + a2o + H // 4] = np.asarray(p["a2"])
        postb[0, 1 * HP + a2o:1 * HP + a2o + H // 4] = np.asarray(p["ab2"])[0]
        postw[a2o:a2o + H // 4, 2 * HP + ho:2 * HP + ho + H] = (
            np.asarray(p["a3"], np.float32).reshape(-1, 1) * np.ones((1, H), np.float32))
        postb[0, 2 * HP + ho:2 * HP + ho + H] = float(np.asarray(p["ab3"])[0, 0])
        # MLP: H -> H/2 -> H/4 -> C
        postw[ho:ho + H, 3 * HP + a1o:3 * HP + a1o + H // 2] = np.asarray(p["m1"])
        postb[0, 3 * HP + a1o:3 * HP + a1o + H // 2] = np.asarray(p["mb1"])[0]
        postw[a1o:a1o + H // 2, 4 * HP + a2o:4 * HP + a2o + H // 4] = np.asarray(p["m2"])
        postb[0, 4 * HP + a2o:4 * HP + a2o + H // 4] = np.asarray(p["mb2"])[0]
        postw[a2o:a2o + H // 4, 5 * HP + k * CP:5 * HP + k * CP + C] = np.asarray(p["m3"])
        postb[0, 5 * HP + k * CP:5 * HP + k * CP + C] = np.asarray(p["mb3"])[0]

    packed = dict(wih=jnp.asarray(wih, jnp.bfloat16),
                  whh=jnp.asarray(whh, jnp.bfloat16),
                  postw=jnp.asarray(postw, jnp.bfloat16),
                  postb=jnp.asarray(postb, jnp.float32))
    geom = dict(HP=HP, CP=CP, C=C, h_off=h_off)
    return packed, geom


def make_representation_forward(p_img, p_aud, p_txt, common_size):
    """Packs params once and returns a jitted forward(image, audio, text, a_len, t_len)."""
    packed, geom = _pack_representation_params(p_img, p_aud, p_txt, common_size)
    HP, CP, C, h_off = geom["HP"], geom["CP"], geom["C"], geom["h_off"]
    spans = (h_off[1] - h_off[0], h_off[2] - h_off[1], HP - h_off[2])

    def forward(image, audio, text, audio_len, text_len):
        B, T, _ = image.shape
        assert audio.shape[:2] == (B, T) and text.shape[:2] == (B, T)
        b_pad = _round_up(B, 8)

        def prep(x):                                     # (B,T,D) -> (T,b_pad,D)
            xt = jnp.transpose(x, (1, 0, 2))
            return jnp.pad(xt, ((0, 0), (0, b_pad - B), (0, 0)))

        x_cat = jnp.concatenate(
            [prep(image), prep(audio), prep(text),
             jnp.ones((T, b_pad, 1), jnp.float32)], axis=-1)
        x_cat = x_cat.reshape(T * b_pad, x_cat.shape[-1]).astype(jnp.bfloat16)

        lens_b = jnp.zeros((b_pad, 3), jnp.int32)
        lens_b = lens_b.at[:B, 0].set(T)                 # ImageLSTM: no packing
        lens_b = lens_b.at[:B, 1].set(audio_len.astype(jnp.int32))
        lens_b = lens_b.at[:B, 2].set(text_len.astype(jnp.int32))
        lens_vec = jnp.concatenate(
            [jnp.broadcast_to(lens_b[:, k:k + 1], (b_pad, spans[k])) for k in range(3)],
            axis=-1)                                     # (b_pad, HP) per-lane lengths

        vmem = pl.BlockSpec(memory_space=pltpu.MemorySpace.VMEM)
        out = pl.pallas_call(
            _rep_kernel,
            out_shape=jax.ShapeDtypeStruct((b_pad, 3 * CP), jnp.float32),
            in_specs=[vmem] * 6,
            out_specs=vmem,
        )(x_cat, lens_vec, packed["wih"], packed["whh"],
          packed["postw"], packed["postb"])
        return (out[:B, 0 * CP:0 * CP + C],
                out[:B, 1 * CP:1 * CP + C],
                out[:B, 2 * CP:2 * CP + C])

    return jax.jit(forward)


# ---------------------------------------------------------------- synthetic params
def init_branch_params(key, D, H, C):
    """Synthetic params: LSTM(D->H), AttentionNet(H), MLP(H->C).

    LSTM gate columns packed [i, f, o, g]; b = bias_ih + bias_hh.  A real PyTorch
    checkpoint (order [i, f, g, o]) would just be column-permuted here.
    """
    ks = jax.random.split(key, 15)
    s = 0.1

    def rn(k, shape):
        return jax.random.normal(k, shape, jnp.float32) * s

    return dict(
        w_ih=rn(ks[0], (D, 4 * H)), w_hh=rn(ks[1], (H, 4 * H)), b=rn(ks[2], (1, 4 * H)),
        a1=rn(ks[3], (H, H // 2)), ab1=rn(ks[4], (1, H // 2)),
        a2=rn(ks[5], (H // 2, H // 4)), ab2=rn(ks[6], (1, H // 4)),
        a3=rn(ks[7], (1, H // 4)), ab3=rn(ks[8], (1, 1)),
        m1=rn(ks[9], (H, H // 2)), mb1=rn(ks[10], (1, H // 2)),
        m2=rn(ks[11], (H // 2, H // 4)), mb2=rn(ks[12], (1, H // 4)),
        m3=rn(ks[13], (H // 4, C)), mb3=rn(ks[14], (1, C)),
    )


def ref_branch(x, lengths, p):
    """Pure-JAX f32 reference of one modality branch (gate order [i, f, o, g])."""
    B, T, D = x.shape
    H = p["w_hh"].shape[0]

    def step(carry, x_t):
        h, c = carry
        gates = x_t @ p["w_ih"] + h @ p["w_hh"] + p["b"]
        i = jax.nn.sigmoid(gates[:, :H])
        f = jax.nn.sigmoid(gates[:, H:2 * H])
        o = jax.nn.sigmoid(gates[:, 2 * H:3 * H])
        g = jnp.tanh(gates[:, 3 * H:])
        c = f * c + i * g
        h = o * jnp.tanh(c)
        return (h, c), h

    (_, _), hs = jax.lax.scan(
        step, (jnp.zeros((B, H), jnp.float32), jnp.zeros((B, H), jnp.float32)),
        jnp.transpose(x, (1, 0, 2)))                                 # (T, B, H)
    mask = (jnp.arange(T)[:, None] < lengths[None, :]).astype(jnp.float32)[:, :, None]
    hs = hs * mask
    a1 = jax.nn.relu(hs @ p["a1"] + p["ab1"])
    a2 = jax.nn.relu(a1 @ p["a2"] + p["ab2"])
    scores = jnp.sum(a2 * p["a3"], axis=-1) + p["ab3"][0, 0]         # (T, B)
    att = jax.nn.softmax(scores, axis=0)
    sum_h = jnp.sum(att[:, :, None] * hs, axis=0)                    # (B, H)
    e1 = jax.nn.relu(sum_h @ p["m1"] + p["mb1"])
    e2 = jax.nn.relu(e1 @ p["m2"] + p["mb2"])
    return e2 @ p["m3"] + p["mb3"]


if __name__ == "__main__":
    key = jax.random.PRNGKey(0)
    B = 2
    T = 8
    image_in, image_h = 16, 32
    audio_in, audio_h = 12, 32
    text_in, text_h = 20, 16
    common_size = 8

    k = jax.random.split(key, 6)
    image = jax.random.normal(k[0], (B, T, image_in), jnp.float32)
    audio = jax.random.normal(k[1], (B, T, audio_in), jnp.float32)
    text = jax.random.normal(k[2], (B, T, text_in), jnp.float32)
    # pack_padded_sequence requires descending lengths; max length == padded T
    audio_len = jnp.array([8, 6], jnp.int32)
    text_len = jnp.array([8, 5], jnp.int32)

    p_img = init_branch_params(k[3], image_in, image_h, common_size)
    p_aud = init_branch_params(k[4], audio_in, audio_h, common_size)
    p_txt = init_branch_params(k[5], text_in, text_h, common_size)

    # RepresentationModel.forward (single fused Pallas call, params packed once)
    fwd = make_representation_forward(p_img, p_aud, p_txt, common_size)
    e_image, e_audio, e_text = fwd(image, audio, text, audio_len, text_len)
    jax.block_until_ready((e_image, e_audio, e_text))

    # sanity check against pure-JAX f32 reference (kernel uses bf16 MXU operands)
    image_len = jnp.full((B,), T, jnp.int32)
    for out, x, ln, p in ((e_image, image, image_len, p_img),
                          (e_audio, audio, audio_len, p_aud),
                          (e_text, text, text_len, p_txt)):
        ref = ref_branch(x, ln, p)
        assert out.shape == (B, common_size)
        assert jnp.allclose(out, ref, atol=3e-2, rtol=3e-2), (out, ref)

    print("KERNEL_OK")
</pallas_src>

<mosaic_0001>
module attributes {stable_mosaic.version = 11 : i64} {
  func.func @_rep_kernel(%arg0: memref<64x49xbf16, #tpu.memory_space<vmem>>, %arg1: memref<8x128xi32, #tpu.memory_space<vmem>>, %arg2: memref<49x512xbf16, #tpu.memory_space<vmem>>, %arg3: memref<128x512xbf16, #tpu.memory_space<vmem>>, %arg4: memref<128x1024xbf16, #tpu.memory_space<vmem>>, %arg5: memref<1x1024xf32, #tpu.memory_space<vmem>>, %arg6: memref<8x384xf32, #tpu.memory_space<vmem>>) attributes {dimension_semantics = [], scalar_prefetch = 0 : i64, scratch_operands = 0 : i64, tpu.core_type = #tpu.core_type<tc>} {
    %c0 = arith.constant 0 : index
    %c0_0 = arith.constant 0 : index
    %0 = vector.load %arg0[%c0, %c0_0] : memref<64x49xbf16, #tpu.memory_space<vmem>>, vector<64x49xbf16>
    %c0_1 = arith.constant 0 : index
    %c0_2 = arith.constant 0 : index
    %1 = vector.load %arg2[%c0_1, %c0_2] : memref<49x512xbf16, #tpu.memory_space<vmem>>, vector<49x512xbf16>
    %cst = arith.constant dense<0.000000e+00> : vector<64x512xf32>
    %2 = tpu.matmul %0, %1, %cst {dimension_numbers = #tpu.dot_dimension_numbers<[1], [0], [0], [1], [0, 0, 1, 1], [], []>} : vector<64x49xbf16>, vector<49x512xbf16>, vector<64x512xf32> -> vector<64x512xf32>
    %3 = vector.shape_cast %2 : vector<64x512xf32> to vector<8x8x512xf32>
    %c0_3 = arith.constant 0 : index
    %c0_4 = arith.constant 0 : index
    %4 = vector.load %arg3[%c0_3, %c0_4] : memref<128x512xbf16, #tpu.memory_space<vmem>>, vector<128x512xbf16>
    %cst_5 = arith.constant 0.000000e+00 : f32
    %5 = vector.broadcast %cst_5 : f32 to vector<8x128xf32>
    %cst_6 = arith.constant 0.000000e+00 : f32
    %6 = vector.broadcast %cst_6 : f32 to vector<8x128xf32>
    %7 = vector.extract_strided_slice %3 {offsets = [0, 0, 0], sizes = [1, 8, 512], strides = [1, 1, 1]} : vector<8x8x512xf32> to vector<1x8x512xf32>
    %8 = vector.shape_cast %7 : vector<1x8x512xf32> to vector<8x512xf32>
    %9 = arith.truncf %5 : vector<8x128xf32> to vector<8x128xbf16>
    %cst_7 = arith.constant dense<0.000000e+00> : vector<8x512xf32>
    %10 = tpu.matmul %9, %4, %cst_7 {dimension_numbers = #tpu.dot_dimension_numbers<[1], [0], [0], [1], [0, 0, 1, 1], [], []>} : vector<8x128xbf16>, vector<128x512xbf16>, vector<8x512xf32> -> vector<8x512xf32>
    %11 = arith.addf %8, %10 : vector<8x512xf32>
    %12 = vector.extract_strided_slice %11 {offsets = [0, 0], sizes = [8, 384], strides = [1, 1]} : vector<8x512xf32> to vector<8x384xf32>
    %13 = arith.negf %12 : vector<8x384xf32>
    %14 = math.exp %13 : vector<8x384xf32>
    %cst_8 = arith.constant 1.000000e+00 : f32
    %15 = vector.broadcast %cst_8 : f32 to vector<8x384xf32>
    %16 = arith.addf %15, %14 : vector<8x384xf32>
    %17 = arith.divf %15, %16 : vector<8x384xf32>
    %18 = vector.extract_strided_slice %17 {offsets = [0, 0], sizes = [8, 128], strides = [1, 1]} : vector<8x384xf32> to vector<8x128xf32>
    %19 = vector.extract_strided_slice %17 {offsets = [0, 128], sizes = [8, 128], strides = [1, 1]} : vector<8x384xf32> to vector<8x128xf32>
    %20 = vector.extract_strided_slice %17 {offsets = [0, 256], sizes = [8, 128], strides = [1, 1]} : vector<8x384xf32> to vector<8x128xf32>
    %21 = vector.extract_strided_slice %11 {offsets = [0, 384], sizes = [8, 128], strides = [1, 1]} : vector<8x512xf32> to vector<8x128xf32>
    %22 = math.tanh %21 : vector<8x128xf32>
    %23 = arith.mulf %19, %6 : vector<8x128xf32>
    %24 = arith.mulf %18, %22 : vector<8x128xf32>
    %25 = arith.addf %23, %24 : vector<8x128xf32>
    %26 = math.tanh %25 : vector<8x128xf32>
    %27 = arith.mulf %20, %26 : vector<8x128xf32>
    %28 = vector.extract_strided_slice %3 {offsets = [1, 0, 0], sizes = [1, 8, 512], strides = [1, 1, 1]} : vector<8x8x512xf32> to vector<1x8x512xf32>
    %29 = vector.shape_cast %28 : vector<1x8x512xf32> to vector<8x512xf32>
    %30 = arith.truncf %27 : vector<8x128xf32> to vector<8x128xbf16>
    %cst_9 = arith.constant dense<0.000000e+00> : vector<8x512xf32>
    %31 = tpu.matmul %30, %4, %cst_9 {dimension_numbers = #tpu.dot_dimension_numbers<[1], [0], [0], [1], [0, 0, 1, 1], [], []>} : vector<8x128xbf16>, vector<128x512xbf16>, vector<8x512xf32> -> vector<8x512xf32>
    %32 = arith.addf %29, %31 : vector<8x512xf32>
    %33 = vector.extract_strided_slice %32 {offsets = [0, 0], sizes = [8, 384], strides = [1, 1]} : vector<8x512xf32> to vector<8x384xf32>
    %34 = arith.negf %33 : vector<8x384xf32>
    %35 = math.exp %34 : vector<8x384xf32>
    %cst_10 = arith.constant 1.000000e+00 : f32
    %36 = vector.broadcast %cst_10 : f32 to vector<8x384xf32>
    %37 = arith.addf %36, %35 : vector<8x384xf32>
    %38 = arith.divf %36, %37 : vector<8x384xf32>
    %39 = vector.extract_strided_slice %38 {offsets = [0, 0], sizes = [8, 128], strides = [1, 1]} : vector<8x384xf32> to vector<8x128xf32>
    %40 = vector.extract_strided_slice %38 {offsets = [0, 128], sizes = [8, 128], strides = [1, 1]} : vector<8x384xf32> to vector<8x128xf32>
    %41 = vector.extract_strided_slice %38 {offsets = [0, 256], sizes = [8, 128], strides = [1, 1]} : vector<8x384xf32> to vector<8x128xf32>
    %42 = vector.extract_strided_slice %32 {offsets = [0, 384], sizes = [8, 128], strides = [1, 1]} : vector<8x512xf32> to vector<8x128xf32>
    %43 = math.tanh %42 : vector<8x128xf32>
    %44 = arith.mulf %40, %25 : vector<8x128xf32>
    %45 = arith.mulf %39, %43 : vector<8x128xf32>
    %46 = arith.addf %44, %45 : vector<8x128xf32>
    %47 = math.tanh %46 : vector<8x128xf32>
    %48 = arith.mulf %41, %47 : vector<8x128xf32>
    %49 = vector.extract_strided_slice %3 {offsets = [2, 0, 0], sizes = [1, 8, 512], strides = [1, 1, 1]} : vector<8x8x512xf32> to vector<1x8x512xf32>
    %50 = vector.shape_cast %49 : vector<1x8x512xf32> to vector<8x512xf32>
    %51 = arith.truncf %48 : vector<8x128xf32> to vector<8x128xbf16>
    %cst_11 = arith.constant dense<0.000000e+00> : vector<8x512xf32>
    %52 = tpu.matmul %51, %4, %cst_11 {dimension_numbers = #tpu.dot_dimension_numbers<[1], [0], [0], [1], [0, 0, 1, 1], [], []>} : vector<8x128xbf16>, vector<128x512xbf16>, vector<8x512xf32> -> vector<8x512xf32>
    %53 = arith.addf %50, %52 : vector<8x512xf32>
    %54 = vector.extract_strided_slice %53 {offsets = [0, 0], sizes = [8, 384], strides = [1, 1]} : vector<8x512xf32> to vector<8x384xf32>
    %55 = arith.negf %54 : vector<8x384xf32>
    %56 = math.exp %55 : vector<8x384xf32>
    %cst_12 = arith.constant 1.000000e+00 : f32
    %57 = vector.broadcast %cst_12 : f32 to vector<8x384xf32>
    %58 = arith.addf %57, %56 : vector<8x384xf32>
    %59 = arith.divf %57, %58 : vector<8x384xf32>
    %60 = vector.extract_strided_slice %59 {offsets = [0, 0], sizes = [8, 128], strides = [1, 1]} : vector<8x384xf32> to vector<8x128xf32>
    %61 = vector.extract_strided_slice %59 {offsets = [0, 128], sizes = [8, 128], strides = [1, 1]} : vector<8x384xf32> to vector<8x128xf32>
    %62 = vector.extract_strided_slice %59 {offsets = [0, 256], sizes = [8, 128], strides = [1, 1]} : vector<8x384xf32> to vector<8x128xf32>
    %63 = vector.extract_strided_slice %53 {offsets = [0, 384], sizes = [8, 128], strides = [1, 1]} : vector<8x512xf32> to vector<8x128xf32>
    %64 = math.tanh %63 : vector<8x128xf32>
    %65 = arith.mulf %61, %46 : vector<8x128xf32>
    %66 = arith.mulf %60, %64 : vector<8x128xf32>
    %67 = arith.addf %65, %66 : vector<8x128xf32>
    %68 = math.tanh %67 : vector<8x128xf32>
    %69 = arith.mulf %62, %68 : vector<8x128xf32>
    %70 = vector.extract_strided_slice %3 {offsets = [3, 0, 0], sizes = [1, 8, 512], strides = [1, 1, 1]} : vector<8x8x512xf32> to vector<1x8x512xf32>
    %71 = vector.shape_cast %70 : vector<1x8x512xf32> to vector<8x512xf32>
    %72 = arith.truncf %69 : vector<8x128xf32> to vector<8x128xbf16>
    %cst_13 = arith.constant dense<0.000000e+00> : vector<8x512xf32>
    %73 = tpu.matmul %72, %4, %cst_13 {dimension_numbers = #tpu.dot_dimension_numbers<[1], [0], [0], [1], [0, 0, 1, 1], [], []>} : vector<8x128xbf16>, vector<128x512xbf16>, vector<8x512xf32> -> vector<8x512xf32>
    %74 = arith.addf %71, %73 : vector<8x512xf32>
    %75 = vector.extract_strided_slice %74 {offsets = [0, 0], sizes = [8, 384], strides = [1, 1]} : vector<8x512xf32> to vector<8x384xf32>
    %76 = arith.negf %75 : vector<8x384xf32>
    %77 = math.exp %76 : vector<8x384xf32>
    %cst_14 = arith.constant 1.000000e+00 : f32
    %78 = vector.broadcast %cst_14 : f32 to vector<8x384xf32>
    %79 = arith.addf %78, %77 : vector<8x384xf32>
    %80 = arith.divf %78, %79 : vector<8x384xf32>
    %81 = vector.extract_strided_slice %80 {offsets = [0, 0], sizes = [8, 128], strides = [1, 1]} : vector<8x384xf32> to vector<8x128xf32>
    %82 = vector.extract_strided_slice %80 {offsets = [0, 128], sizes = [8, 128], strides = [1, 1]} : vector<8x384xf32> to vector<8x128xf32>
    %83 = vector.extract_strided_slice %80 {offsets = [0, 256], sizes = [8, 128], strides = [1, 1]} : vector<8x384xf32> to vector<8x128xf32>
    %84 = vector.extract_strided_slice %74 {offsets = [0, 384], sizes = [8, 128], strides = [1, 1]} : vector<8x512xf32> to vector<8x128xf32>
    %85 = math.tanh %84 : vector<8x128xf32>
    %86 = arith.mulf %82, %67 : vector<8x128xf32>
    %87 = arith.mulf %81, %85 : vector<8x128xf32>
    %88 = arith.addf %86, %87 : vector<8x128xf32>
    %89 = math.tanh %88 : vector<8x128xf32>
    %90 = arith.mulf %83, %89 : vector<8x128xf32>
    %91 = vector.extract_strided_slice %3 {offsets = [4, 0, 0], sizes = [1, 8, 512], strides = [1, 1, 1]} : vector<8x8x512xf32> to vector<1x8x512xf32>
    %92 = vector.shape_cast %91 : vector<1x8x512xf32> to vector<8x512xf32>
    %93 = arith.truncf %90 : vector<8x128xf32> to vector<8x128xbf16>
    %cst_15 = arith.constant dense<0.000000e+00> : vector<8x512xf32>
    %94 = tpu.matmul %93, %4, %cst_15 {dimension_numbers = #tpu.dot_dimension_numbers<[1], [0], [0], [1], [0, 0, 1, 1], [], []>} : vector<8x128xbf16>, vector<128x512xbf16>, vector<8x512xf32> -> vector<8x512xf32>
    %95 = arith.addf %92, %94 : vector<8x512xf32>
    %96 = vector.extract_strided_slice %95 {offsets = [0, 0], sizes = [8, 384], strides = [1, 1]} : vector<8x512xf32> to vector<8x384xf32>
    %97 = arith.negf %96 : vector<8x384xf32>
    %98 = math.exp %97 : vector<8x384xf32>
    %cst_16 = arith.constant 1.000000e+00 : f32
    %99 = vector.broadcast %cst_16 : f32 to vector<8x384xf32>
    %100 = arith.addf %99, %98 : vector<8x384xf32>
    %101 = arith.divf %99, %100 : vector<8x384xf32>
    %102 = vector.extract_strided_slice %101 {offsets = [0, 0], sizes = [8, 128], strides = [1, 1]} : vector<8x384xf32> to vector<8x128xf32>
    %103 = vector.extract_strided_slice %101 {offsets = [0, 128], sizes = [8, 128], strides = [1, 1]} : vector<8x384xf32> to vector<8x128xf32>
    %104 = vector.extract_strided_slice %101 {offsets = [0, 256], sizes = [8, 128], strides = [1, 1]} : vector<8x384xf32> to vector<8x128xf32>
    %105 = vector.extract_strided_slice %95 {offsets = [0, 384], sizes = [8, 128], strides = [1, 1]} : vector<8x512xf32> to vector<8x128xf32>
    %106 = math.tanh %105 : vector<8x128xf32>
    %107 = arith.mulf %103, %88 : vector<8x128xf32>
    %108 = arith.mulf %102, %106 : vector<8x128xf32>
    %109 = arith.addf %107, %108 : vector<8x128xf32>
    %110 = math.tanh %109 : vector<8x128xf32>
    %111 = arith.mulf %104, %110 : vector<8x128xf32>
    %112 = vector.extract_strided_slice %3 {offsets = [5, 0, 0], sizes = [1, 8, 512], strides = [1, 1, 1]} : vector<8x8x512xf32> to vector<1x8x512xf32>
    %113 = vector.shape_cast %112 : vector<1x8x512xf32> to vector<8x512xf32>
    %114 = arith.truncf %111 : vector<8x128xf32> to vector<8x128xbf16>
    %cst_17 = arith.constant dense<0.000000e+00> : vector<8x512xf32>
    %115 = tpu.matmul %114, %4, %cst_17 {dimension_numbers = #tpu.dot_dimension_numbers<[1], [0], [0], [1], [0, 0, 1, 1], [], []>} : vector<8x128xbf16>, vector<128x512xbf16>, vector<8x512xf32> -> vector<8x512xf32>
    %116 = arith.addf %113, %115 : vector<8x512xf32>
    %117 = vector.extract_strided_slice %116 {offsets = [0, 0], sizes = [8, 384], strides = [1, 1]} : vector<8x512xf32> to vector<8x384xf32>
    %118 = arith.negf %117 : vector<8x384xf32>
    %119 = math.exp %118 : vector<8x384xf32>
    %cst_18 = arith.constant 1.000000e+00 : f32
    %120 = vector.broadcast %cst_18 : f32 to vector<8x384xf32>
    %121 = arith.addf %120, %119 : vector<8x384xf32>
    %122 = arith.divf %120, %121 : vector<8x384xf32>
    %123 = vector.extract_strided_slice %122 {offsets = [0, 0], sizes = [8, 128], strides = [1, 1]} : vector<8x384xf32> to vector<8x128xf32>
    %124 = vector.extract_strided_slice %122 {offsets = [0, 128], sizes = [8, 128], strides = [1, 1]} : vector<8x384xf32> to vector<8x128xf32>
    %125 = vector.extract_strided_slice %122 {offsets = [0, 256], sizes = [8, 128], strides = [1, 1]} : vector<8x384xf32> to vector<8x128xf32>
    %126 = vector.extract_strided_slice %116 {offsets = [0, 384], sizes = [8, 128], strides = [1, 1]} : vector<8x512xf32> to vector<8x128xf32>
    %127 = math.tanh %126 : vector<8x128xf32>
    %128 = arith.mulf %124, %109 : vector<8x128xf32>
    %129 = arith.mulf %123, %127 : vector<8x128xf32>
    %130 = arith.addf %128, %129 : vector<8x128xf32>
    %131 = math.tanh %130 : vector<8x128xf32>
    %132 = arith.mulf %125, %131 : vector<8x128xf32>
    %133 = vector.extract_strided_slice %3 {offsets = [6, 0, 0], sizes = [1, 8, 512], strides = [1, 1, 1]} : vector<8x8x512xf32> to vector<1x8x512xf32>
    %134 = vector.shape_cast %133 : vector<1x8x512xf32> to vector<8x512xf32>
    %135 = arith.truncf %132 : vector<8x128xf32> to vector<8x128xbf16>
    %cst_19 = arith.constant dense<0.000000e+00> : vector<8x512xf32>
    %136 = tpu.matmul %135, %4, %cst_19 {dimension_numbers = #tpu.dot_dimension_numbers<[1], [0], [0], [1], [0, 0, 1, 1], [], []>} : vector<8x128xbf16>, vector<128x512xbf16>, vector<8x512xf32> -> vector<8x512xf32>
    %137 = arith.addf %134, %136 : vector<8x512xf32>
    %138 = vector.extract_strided_slice %137 {offsets = [0, 0], sizes = [8, 384], strides = [1, 1]} : vector<8x512xf32> to vector<8x384xf32>
    %139 = arith.negf %138 : vector<8x384xf32>
    %140 = math.exp %139 : vector<8x384xf32>
    %cst_20 = arith.constant 1.000000e+00 : f32
    %141 = vector.broadcast %cst_20 : f32 to vector<8x384xf32>
    %142 = arith.addf %141, %140 : vector<8x384xf32>
    %143 = arith.divf %141, %142 : vector<8x384xf32>
    %144 = vector.extract_strided_slice %143 {offsets = [0, 0], sizes = [8, 128], strides = [1, 1]} : vector<8x384xf32> to vector<8x128xf32>
    %145 = vector.extract_strided_slice %143 {offsets = [0, 128], sizes = [8, 128], strides = [1, 1]} : vector<8x384xf32> to vector<8x128xf32>
    %146 = vector.extract_strided_slice %143 {offsets = [0, 256], sizes = [8, 128], strides = [1, 1]} : vector<8x384xf32> to vector<8x128xf32>
    %147 = vector.extract_strided_slice %137 {offsets = [0, 384], sizes = [8, 128], strides = [1, 1]} : vector<8x512xf32> to vector<8x128xf32>
    %148 = math.tanh %147 : vector<8x128xf32>
    %149 = arith.mulf %145, %130 : vector<8x128xf32>
    %150 = arith.mulf %144, %148 : vector<8x128xf32>
    %151 = arith.addf %149, %150 : vector<8x128xf32>
    %152 = math.tanh %151 : vector<8x128xf32>
    %153 = arith.mulf %146, %152 : vector<8x128xf32>
    %154 = vector.extract_strided_slice %3 {offsets = [7, 0, 0], sizes = [1, 8, 512], strides = [1, 1, 1]} : vector<8x8x512xf32> to vector<1x8x512xf32>
    %155 = vector.shape_cast %154 : vector<1x8x512xf32> to vector<8x512xf32>
    %156 = arith.truncf %153 : vector<8x128xf32> to vector<8x128xbf16>
    %cst_21 = arith.constant dense<0.000000e+00> : vector<8x512xf32>
    %157 = tpu.matmul %156, %4, %cst_21 {dimension_numbers = #tpu.dot_dimension_numbers<[1], [0], [0], [1], [0, 0, 1, 1], [], []>} : vector<8x128xbf16>, vector<128x512xbf16>, vector<8x512xf32> -> vector<8x512xf32>
    %158 = arith.addf %155, %157 : vector<8x512xf32>
    %159 = vector.extract_strided_slice %158 {offsets = [0, 0], sizes = [8, 384], strides = [1, 1]} : vector<8x512xf32> to vector<8x384xf32>
    %160 = arith.negf %159 : vector<8x384xf32>
    %161 = math.exp %160 : vector<8x384xf32>
    %cst_22 = arith.constant 1.000000e+00 : f32
    %162 = vector.broadcast %cst_22 : f32 to vector<8x384xf32>
    %163 = arith.addf %162, %161 : vector<8x384xf32>
    %164 = arith.divf %162, %163 : vector<8x384xf32>
    %165 = vector.extract_strided_slice %164 {offsets = [0, 0], sizes = [8, 128], strides = [1, 1]} : vector<8x384xf32> to vector<8x128xf32>
    %166 = vector.extract_strided_slice %164 {offsets = [0, 128], sizes = [8, 128], strides = [1, 1]} : vector<8x384xf32> to vector<8x128xf32>
    %167 = vector.extract_strided_slice %164 {offsets = [0, 256], sizes = [8, 128], strides = [1, 1]} : vector<8x384xf32> to vector<8x128xf32>
    %168 = vector.extract_strided_slice %158 {offsets = [0, 384], sizes = [8, 128], strides = [1, 1]} : vector<8x512xf32> to vector<8x128xf32>
    %169 = math.tanh %168 : vector<8x128xf32>
    %170 = arith.mulf %166, %151 : vector<8x128xf32>
    %171 = arith.mulf %165, %169 : vector<8x128xf32>
    %172 = arith.addf %170, %171 : vector<8x128xf32>
    %173 = math.tanh %172 : vector<8x128xf32>
    %174 = arith.mulf %167, %173 : vector<8x128xf32>
    %175 = vector.shape_cast %27 : vector<8x128xf32> to vector<1x8x128xf32>
    %176 = vector.shape_cast %48 : vector<8x128xf32> to vector<1x8x128xf32>
    %177 = vector.shape_cast %69 : vector<8x128xf32> to vector<1x8x128xf32>
    %178 = vector.shape_cast %90 : vector<8x128xf32> to vector<1x8x128xf32>
    %179 = vector.shape_cast %111 : vector<8x128xf32> to vector<1x8x128xf32>
    %180 = vector.shape_cast %132 : vector<8x128xf32> to vector<1x8x128xf32>
    %181 = vector.shape_cast %153 : vector<8x128xf32> to vector<1x8x128xf32>
    %182 = vector.shape_cast %174 : vector<8x128xf32> to vector<1x8x128xf32>
    %183 = tpu.concatenate %175, %176, %177, %178, %179, %180, %181, %182 in 0 : vector<1x8x128xf32>, vector<1x8x128xf32>, vector<1x8x128xf32>, vector<1x8x128xf32>, vector<1x8x128xf32>, vector<1x8x128xf32>, vector<1x8x128xf32>, vector<1x8x128xf32> -> vector<8x8x128xf32>
    %184 = tpu.iota {dimensions = array<i32: 0>} : vector<8x8x128xi32>
    %c0_23 = arith.constant 0 : index
    %c0_24 = arith.constant 0 : index
    %185 = vector.load %arg1[%c0_23, %c0_24] : memref<8x128xi32, #tpu.memory_space<vmem>>, vector<8x128xi32>
    %186 = vector.shape_cast %185 : vector<8x128xi32> to vector<1x8x128xi32>
    %187 = vector.broadcast %186 : vector<1x8x128xi32> to vector<8x8x128xi32>
    %188 = arith.cmpi slt, %184, %187 : vector<8x8x128xi32>
    %189 = arith.extui %188 : vector<8x8x128xi1> to vector<8x8x128xi32>
    %190 = arith.sitofp %189 : vector<8x8x128xi32> to vector<8x8x128xf32>
    %191 = arith.mulf %183, %190 : vector<8x8x128xf32>
    %192 = vector.shape_cast %191 : vector<8x8x128xf32> to vector<64x128xf32>
    %193 = arith.truncf %192 : vector<64x128xf32> to vector<64x128xbf16>
    %c0_25 = arith.constant 0 : index
    %c0_26 = arith.constant 0 : index
    %194 = vector.load %arg4[%c0_25, %c0_26] : memref<128x1024xbf16, #tpu.memory_space<vmem>>, vector<128x128xbf16>
    %cst_27 = arith.constant dense<0.000000e+00> : vector<64x128xf32>
    %195 = tpu.matmul %193, %194, %cst_27 {dimension_numbers = #tpu.dot_dimension_numbers<[1], [0], [0], [1], [0, 0, 1, 1], [], []>} : vector<64x128xbf16>, vector<128x128xbf16>, vector<64x128xf32> -> vector<64x128xf32>
    %c0_28 = arith.constant 0 : index
    %c0_29 = arith.constant 0 : index
    %196 = vector.load %arg5[%c0_28, %c0_29] : memref<1x1024xf32, #tpu.memory_space<vmem>>, vector<1x128xf32>
    %197 = vector.broadcast %196 : vector<1x128xf32> to vector<64x128xf32>
    %198 = arith.addf %195, %197 : vector<64x128xf32>
    %cst_30 = arith.constant 0.000000e+00 : f32
    %199 = vector.broadcast %cst_30 : f32 to vector<64x128xf32>
    %200 = arith.maximumf %198, %199 : vector<64x128xf32>
    %201 = arith.truncf %200 : vector<64x128xf32> to vector<64x128xbf16>
    %c0_31 = arith.constant 0 : index
    %c128 = arith.constant 128 : index
    %202 = vector.load %arg4[%c0_31, %c128] : memref<128x1024xbf16, #tpu.memory_space<vmem>>, vector<128x128xbf16>
    %cst_32 = arith.constant dense<0.000000e+00> : vector<64x128xf32>
    %203 = tpu.matmul %201, %202, %cst_32 {dimension_numbers = #tpu.dot_dimension_numbers<[1], [0], [0], [1], [0, 0, 1, 1], [], []>} : vector<64x128xbf16>, vector<128x128xbf16>, vector<64x128xf32> -> vector<64x128xf32>
    %c0_33 = arith.constant 0 : index
    %c128_34 = arith.constant 128 : index
    %204 = vector.load %arg5[%c0_33, %c128_34] : memref<1x1024xf32, #tpu.memory_space<vmem>>, vector<1x128xf32>
    %205 = vector.broadcast %204 : vector<1x128xf32> to vector<64x128xf32>
    %206 = arith.addf %203, %205 : vector<64x128xf32>
    %cst_35 = arith.constant 0.000000e+00 : f32
    %207 = vector.broadcast %cst_35 : f32 to vector<64x128xf32>
    %208 = arith.maximumf %206, %207 : vector<64x128xf32>
    %209 = arith.truncf %208 : vector<64x128xf32> to vector<64x128xbf16>
    %c0_36 = arith.constant 0 : index
    %c256 = arith.constant 256 : index
    %210 = vector.load %arg4[%c0_36, %c256] : memref<128x1024xbf16, #tpu.memory_space<vmem>>, vector<128x128xbf16>
    %cst_37 = arith.constant dense<0.000000e+00> : vector<64x128xf32>
    %211 = tpu.matmul %209, %210, %cst_37 {dimension_numbers = #tpu.dot_dimension_numbers<[1], [0], [0], [1], [0, 0, 1, 1], [], []>} : vector<64x128xbf16>, vector<128x128xbf16>, vector<64x128xf32> -> vector<64x128xf32>
    %c0_38 = arith.constant 0 : index
    %c256_39 = arith.constant 256 : index
    %212 = vector.load %arg5[%c0_38, %c256_39] : memref<1x1024xf32, #tpu.memory_space<vmem>>, vector<1x128xf32>
    %213 = vector.broadcast %212 : vector<1x128xf32> to vector<64x128xf32>
    %214 = arith.addf %211, %213 : vector<64x128xf32>
    %215 = vector.shape_cast %214 : vector<64x128xf32> to vector<8x8x128xf32>
    %cst_40 = arith.constant dense<0xFF800000> : vector<8x128xf32>
    %216 = vector.multi_reduction <maximumf>, %215, %cst_40 [0] : vector<8x8x128xf32> to vector<8x128xf32>
    %217 = vector.shape_cast %216 : vector<8x128xf32> to vector<1x8x128xf32>
    %218 = vector.broadcast %217 : vector<1x8x128xf32> to vector<8x8x128xf32>
    %219 = arith.subf %215, %218 : vector<8x8x128xf32>
    %220 = math.exp %219 : vector<8x8x128xf32>
    %cst_41 = arith.constant dense<0.000000e+00> : vector<8x128xf32>
    %221 = vector.multi_reduction <add>, %220, %cst_41 [0] : vector<8x8x128xf32> to vector<8x128xf32>
    %222 = vector.shape_cast %221 : vector<8x128xf32> to vector<1x8x128xf32>
    %223 = tpu.reciprocal %222 {approx = true} : vector<1x8x128xf32> -> vector<1x8x128xf32>
    %224 = vector.broadcast %223 : vector<1x8x128xf32> to vector<8x8x128xf32>
    %225 = arith.mulf %220, %224 : vector<8x8x128xf32>
    %226 = arith.mulf %225, %191 : vector<8x8x128xf32>
    %cst_42 = arith.constant dense<0.000000e+00> : vector<8x128xf32>
    %227 = vector.multi_reduction <add>, %226, %cst_42 [0] : vector<8x8x128xf32> to vector<8x128xf32>
    %228 = arith.truncf %227 : vector<8x128xf32> to vector<8x128xbf16>
    %c0_43 = arith.constant 0 : index
    %c384 = arith.constant 384 : index
    %229 = vector.load %arg4[%c0_43, %c384] : memref<128x1024xbf16, #tpu.memory_space<vmem>>, vector<128x128xbf16>
    %cst_44 = arith.constant dense<0.000000e+00> : vector<8x128xf32>
    %230 = tpu.matmul %228, %229, %cst_44 {dimension_numbers = #tpu.dot_dimension_numbers<[1], [0], [0], [1], [0, 0, 1, 1], [], []>} : vector<8x128xbf16>, vector<128x128xbf16>, vector<8x128xf32> -> vector<8x128xf32>
    %c0_45 = arith.constant 0 : index
    %c384_46 = arith.constant 384 : index
    %231 = vector.load %arg5[%c0_45, %c384_46] : memref<1x1024xf32, #tpu.memory_space<vmem>>, vector<1x128xf32>
    %232 = vector.broadcast %231 : vector<1x128xf32> to vector<8x128xf32>
    %233 = arith.addf %230, %232 : vector<8x128xf32>
    %cst_47 = arith.constant 0.000000e+00 : f32
    %234 = vector.broadcast %cst_47 : f32 to vector<8x128xf32>
    %235 = arith.maximumf %233, %234 : vector<8x128xf32>
    %236 = arith.truncf %235 : vector<8x128xf32> to vector<8x128xbf16>
    %c0_48 = arith.constant 0 : index
    %c512 = arith.constant 512 : index
    %237 = vector.load %arg4[%c0_48, %c512] : memref<128x1024xbf16, #tpu.memory_space<vmem>>, vector<128x128xbf16>
    %cst_49 = arith.constant dense<0.000000e+00> : vector<8x128xf32>
    %238 = tpu.matmul %236, %237, %cst_49 {dimension_numbers = #tpu.dot_dimension_numbers<[1], [0], [0], [1], [0, 0, 1, 1], [], []>} : vector<8x128xbf16>, vector<128x128xbf16>, vector<8x128xf32> -> vector<8x128xf32>
    %c0_50 = arith.constant 0 : index
    %c512_51 = arith.constant 512 : index
    %239 = vector.load %arg5[%c0_50, %c512_51] : memref<1x1024xf32, #tpu.memory_space<vmem>>, vector<1x128xf32>
    %240 = vector.broadcast %239 : vector<1x128xf32> to vector<8x128xf32>
    %241 = arith.addf %238, %240 : vector<8x128xf32>
    %cst_52 = arith.constant 0.000000e+00 : f32
    %242 = vector.broadcast %cst_52 : f32 to vector<8x128xf32>
    %243 = arith.maximumf %241, %242 : vector<8x128xf32>
    %244 = arith.truncf %243 : vector<8x128xf32> to vector<8x128xbf16>
    %c0_53 = arith.constant 0 : index
    %c640 = arith.constant 640 : index
    %245 = vector.load %arg4[%c0_53, %c640] : memref<128x1024xbf16, #tpu.memory_space<vmem>>, vector<128x384xbf16>
    %cst_54 = arith.constant dense<0.000000e+00> : vector<8x384xf32>
    %246 = tpu.matmul %244, %245, %cst_54 {dimension_numbers = #tpu.dot_dimension_numbers<[1], [0], [0], [1], [0, 0, 1, 1], [], []>} : vector<8x128xbf16>, vector<128x384xbf16>, vector<8x384xf32> -> vector<8x384xf32>
    %c0_55 = arith.constant 0 : index
    %c640_56 = arith.constant 640 : index
    %247 = vector.load %arg5[%c0_55, %c640_56] : memref<1x1024xf32, #tpu.memory_space<vmem>>, vector<1x384xf32>
    %248 = vector.broadcast %247 : vector<1x384xf32> to vector<8x384xf32>
    %249 = arith.addf %246, %248 : vector<8x384xf32>
    %c0_57 = arith.constant 0 : index
    %c0_58 = arith.constant 0 : index
    %250 = vector.load %arg6[%c0_57, %c0_58] : memref<8x384xf32, #tpu.memory_space<vmem>>, vector<8x384xf32>
    tpu.vector_store %arg6[%c0_57, %c0_58], %249 {strides = array<i32>} : memref<8x384xf32, #tpu.memory_space<vmem>>, vector<8x384xf32>,
    return
  }
}

</mosaic_0001>

<llo_original>
// kernel: forward.1
$region0: #{forward.1}
  #allocation0 [shape = 'u32[]', space=smem, size = 0x4, offset = 0x4, fixed_abs, tag = 'smem constant byte address 0x4 - core index']
  #allocation1 [shape = 'u32[72,128]{1,0:T(1,128)}', space=vmem, size = 0x9000, scoped, tag = 'internal scratch']
  %s0 = inlined_call_operand.vmem [shape: bf16[64,49], index: 0, kind: input, shape index: {}]
  %s1 = inlined_call_operand.vmem [shape: s32[8,128], index: 1, kind: input, shape index: {}]
  %s2 = inlined_call_operand.vmem [shape: bf16[49,512], index: 2, kind: input, shape index: {}]
  %s3 = inlined_call_operand.hbm [shape: bf16[128,512], index: 3, kind: input, shape index: {}]
  %s4 = inlined_call_operand.hbm [shape: bf16[128,1024], index: 4, kind: input, shape index: {}]
  %s5 = inlined_call_operand.vmem [shape: f32[1,1024], index: 5, kind: input, shape index: {}]
  %s6 = inlined_call_operand.vmem [shape: f32[8,384], index: 6, kind: output, shape index: {}]
  %s7 = sld [smem:[#allocation0]]
  $region42: #{forward.1} parent=0
    _
  %s9 = ssub.s32 1, %s7
  %s10 = scalar_select 0, %s9, %s7
  $region1: #{forward.1} parent=0
    #allocation2 [shape = 'u8[131072]{0}', space=vmem, size = 0x20000, scoped, tag = 'input window, operand 3, single buffered']
    #allocation3 [shape = 's32[1]{0}', space=sflag, size = 0x4, scoped, tag = 'scoped memory for forward.1']
    #allocation4 [shape = 'u8[262144]{0}', space=vmem, size = 0x40000, scoped, tag = 'input window, operand 4, single buffered']
    #allocation5 [shape = 's32[1]{0}', space=sflag, size = 0x4, scoped, tag = 'scoped memory for forward.1']
    %11 = vsyncpa [#allocation3], 0
    %12 = vsyncpa [#allocation5], 0
    // Predicated region
    $region2: #{forward.1} parent=1 // pred_check
      _
    $region3: #{forward.1} parent=1 // pred_check_branch
      %14 = sbr.rel (0) target = $region5
    $region4: #{forward.1} parent=1 // pred_region
      _
    $region5: #{forward.1} parent=1 // pred_fallthru
      _
    // Predicated region
    $region6: #{forward.1} parent=1 // pred_check
      _
    $region7: #{forward.1} parent=1 // pred_check_branch
      %16 = sbr.rel (0) target = $region9
    $region8: #{forward.1} parent=1 // pred_region
      _
    $region9: #{forward.1} parent=1 // pred_fallthru
      _
    // Predicated region
    $region10: #{forward.1} parent=1 // pred_check
      _
    $region11: #{forward.1} parent=1 // pred_check_branch
      %18 = sbr.rel (0) target = $region13
    $region12: #{forward.1} parent=1 // pred_region
      _
    $region13: #{forward.1} parent=1 // pred_fallthru
      _
    // Predicated region
    $region14: #{forward.1} parent=1 // pred_check
      _
    $region15: #{forward.1} parent=1 // pred_check_branch
      %20 = sbr.rel (0) target = $region17
    $region16: #{forward.1} parent=1 // pred_region
      %22 = vsyncadd [#allocation3], 0
      %s23 = sshll.u32 %s3, 4
      %s24 = int_to_ptr.hbm [resolvable:$true] %s23
      %s25 = sshll.u32 [#allocation2], 4
      %s26 = int_to_ptr.vmem [resolvable:$true] %s25
      %31 = dma.hbm_to_vmem [thread:$0]  %s24, 4096, %s26, [#allocation3], 256, 256, 16
    $region17: #{forward.1} parent=1 // pred_fallthru
      _
    // Predicated region
    $region18: #{forward.1} parent=1 // pred_check
      _
    $region19: #{forward.1} parent=1 // pred_check_branch
      %33 = sbr.rel (0) target = $region21
    $region20: #{forward.1} parent=1 // pred_region
      %35 = vsyncadd [#allocation5], 0
      %s36 = sshll.u32 %s4, 4
      %s37 = int_to_ptr.hbm [resolvable:$true] %s36
      %s38 = sshll.u32 [#allocation4], 4
      %s39 = int_to_ptr.vmem [resolvable:$true] %s38
      %44 = dma.hbm_to_vmem [thread:$0]  %s37, 8192, %s39, [#allocation5], 512, 512, 32
    $region21: #{forward.1} parent=1 // pred_fallthru
      _
    // Predicated region
    $region22: #{forward.1} parent=1 // pred_check
      _
    $region23: #{forward.1} parent=1 // pred_check_branch
      %46 = sbr.rel (0) target = $region25
    $region24: #{forward.1} parent=1 // pred_region
      _
    $region25: #{forward.1} parent=1 // pred_fallthru
      _
    // Predicated region
    $region26: #{forward.1} parent=1 // pred_check
      _
    $region27: #{forward.1} parent=1 // pred_check_branch
      %48 = sbr.rel (0) target = $region29
    $region28: #{forward.1} parent=1 // pred_region
      %50 = dma.done [#allocation3], 4096
    $region29: #{forward.1} parent=1 // pred_fallthru
      _
    // Predicated region
    $region30: #{forward.1} parent=1 // pred_check
      _
    $region31: #{forward.1} parent=1 // pred_check_branch
      %52 = sbr.rel (0) target = $region33
    $region32: #{forward.1} parent=1 // pred_region
      %54 = dma.done [#allocation5], 8192
    $region33: #{forward.1} parent=1 // pred_fallthru
      _
    %v56 = vld [vmem:[%s0] sm:$0xf]
    %v57 = vld [vmem:[%s0 + $0x4] sm:$0xf]
    %v58 = vld [vmem:[%s0 + $0x8] sm:$0xf]
    %v59 = vld [vmem:[%s0 + $0xc] sm:$0xf]
    %v60 = vld [vmem:[%s0 + $0x10] sm:$0xf]
    %v61 = vld [vmem:[%s0 + $0x14] sm:$0xf]
    %v62 = vld [vmem:[%s0 + $0x18] sm:$0xf]
    %v63 = vld [vmem:[%s0 + $0x1c] sm:$0xf]
    %v64 = vld [vmem:[%s2] sm:$0xff]
    %v65 = vld [vmem:[%s2 + $0x8] sm:$0xff]
    %v66 = vld [vmem:[%s2 + $0x10] sm:$0xff]
    %v67 = vld [vmem:[%s2 + $0x18] sm:$0xff]
    %v68 = vld [vmem:[%s2 + $0x20] sm:$0xff]
    %v69 = vld [vmem:[%s2 + $0x28] sm:$0xff]
    %v70 = vld [vmem:[%s2 + $0x30] sm:$0xff]
    %v71 = vld [vmem:[%s2 + $0x38] sm:$0xff]
    %v72 = vld [vmem:[%s2 + $0x40] sm:$0xff]
    %v73 = vld [vmem:[%s2 + $0x48] sm:$0xff]
    %v74 = vld [vmem:[%s2 + $0x50] sm:$0xff]
    %v75 = vld [vmem:[%s2 + $0x58] sm:$0xff]
    %v76 = vld [vmem:[%s2 + $0x60] sm:$0x11]
    %v77 = vld [vmem:[%s2 + $0x68] sm:$0x11]
    %v86 = vunpack.c.l.b16 %v56
    %v87 = vunpack.c.l.b16 %v57
    %v88 = vunpack.c.l.b16 %v58
    %v89 = vunpack.c.l.b16 %v59
    %v90 = vunpack.c.l.b16 %v60
    %v91 = vunpack.c.l.b16 %v61
    %v92 = vunpack.c.l.b16 %v62
    %v93 = vunpack.c.l.b16 %v63
    %v94 = vpack.c.b16 %v87, %v86
    %v95 = vpack.c.b16 %v89, %v88
    %v96 = vpack.c.b16 %v91, %v90
    %v97 = vpack.c.b16 %v93, %v92
    %v112 = vunpack.c.l.b16 %v64
    %v113 = vunpack.c.h.b16 %v64
    %v114 = vunpack.c.l.b16 %v65
    %v115 = vunpack.c.h.b16 %v65
    %v116 = vunpack.c.l.b16 %v66
    %v117 = vunpack.c.h.b16 %v66
    %v118 = vunpack.c.l.b16 %v67
    %v119 = vunpack.c.h.b16 %v67
    %v120 = vunpack.c.l.b16 %v68
    %v121 = vunpack.c.h.b16 %v68
    %v122 = vunpack.c.l.b16 %v69
    %v123 = vunpack.c.h.b16 %v69
    %v124 = vunpack.c.l.b16 %v70
    %v125 = vunpack.c.h.b16 %v70
    %v126 = vunpack.c.l.b16 %v71
    %v127 = vunpack.c.h.b16 %v71
    %v128 = vunpack.c.l.b16 %v72
    %v129 = vunpack.c.h.b16 %v72
    %v130 = vunpack.c.l.b16 %v73
    %v131 = vunpack.c.h.b16 %v73
    %v132 = vunpack.c.l.b16 %v74
    %v133 = vunpack.c.h.b16 %v74
    %v134 = vunpack.c.l.b16 %v75
    %v135 = vunpack.c.h.b16 %v75
    %v136 = vunpack.c.l.b16 %v76
    %v137 = vunpack.c.h.b16 %v76
    %v138 = vunpack.c.l.b16 %v77
    %v139 = vunpack.c.h.b16 %v77
    %v140 = vpack.c.b16 %v116, %v112
    %v141 = vpack.c.b16 %v117, %v113
    %v142 = vpack.c.b16 %v118, %v114
    %v143 = vpack.c.b16 %v119, %v115
    %v144 = vpack.c.b16 %v124, %v120
    %v145 = vpack.c.b16 %v125, %v121
    %v146 = vpack.c.b16 %v126, %v122
    %v147 = vpack.c.b16 %v127, %v123
    %v148 = vpack.c.b16 %v132, %v128
    %v149 = vpack.c.b16 %v133, %v129
    %v150 = vpack.c.b16 %v134, %v130
    %v151 = vpack.c.b16 %v135, %v131
    %v152 = vpack.c.b16 %v136, %v136
    %v153 = vpack.c.b16 %v137, %v137
    %v154 = vpack.c.b16 %v138, %v138
    %v155 = vpack.c.b16 %v139, %v139
    %vm168 = vcmask 400384
    %v170 = vsel %vm168, %v94, 0
    %v173 = vsel %vm168, %v95, 0
    %v176 = vsel %vm168, %v96, 0
    %v179 = vsel %vm168, %v97, 0
    %vm181 = vcmask 1040384
    %v182 = vsel 0, 4294967295, 65535
    %v183 = vsel %vm181, %v182, 0
    %v185 = vand.u32 %v152, %v183
    %v188 = vand.u32 %v153, %v183
    %v191 = vand.u32 %v154, %v183
    %v194 = vand.u32 %v155, %v183
    %196 = vmatpush.bf16.msra.mxu0 0
    %197 = vmatpush.bf16.msra.mxu0 0
    %198 = vmatpush.bf16.msra.mxu0 0
    %199 = vmatpush.bf16.msra.mxu0 0
    %200 = vmatpush.bf16.msra.mxu0 %v185
    %201 = vmatpush.bf16.msra.mxu0 %v148
    %202 = vmatpush.bf16.msra.mxu0 %v144
    %203 = vmatpush.bf16.msra.mxu0 %v140
    %204 = vmatmul.bf16.gmra.mxu0 %v170
    %v205 = vpop.f32.mrf.mxu0
    %v206 = vadd.f32 0.0, %v205
    %v207 = vpop.f32.mrf.mxu0
    %v208 = vadd.f32 0.0, %v207
    %209 = vmatmul.bf16.gmra.mxu0 %v173
    %v210 = vpop.f32.mrf.mxu0
    %v211 = vadd.f32 0.0, %v210
    %v212 = vpop.f32.mrf.mxu0
    %v213 = vadd.f32 0.0, %v212
    %214 = vmatmul.bf16.gmra.mxu0 %v176
    %v215 = vpop.f32.mrf.mxu0
    %v216 = vadd.f32 0.0, %v215
    %v217 = vpop.f32.mrf.mxu0
    %v218 = vadd.f32 0.0, %v217
    %219 = vmatmul.bf16.gmra.mxu0 %v179
    %v220 = vpop.f32.mrf.mxu0
    %v221 = vadd.f32 0.0, %v220
    %v222 = vpop.f32.mrf.mxu0
    %v223 = vadd.f32 0.0, %v222
    %224 = vdwg.mxu0
    %225 = vmatpush.bf16.msra.mxu0 0
    %226 = vmatpush.bf16.msra.mxu0 0
    %227 = vmatpush.bf16.msra.mxu0 0
    %228 = vmatpush.bf16.msra.mxu0 0
    %229 = vmatpush.bf16.msra.mxu0 %v188
    %230 = vmatpush.bf16.msra.mxu0 %v149
    %231 = vmatpush.bf16.msra.mxu0 %v145
    %232 = vmatpush.bf16.msra.mxu0 %v141
    %233 = vmatmul.bf16.gmra.mxu0 %v170
    %v234 = vpop.f32.mrf.mxu0
    %v235 = vadd.f32 0.0, %v234
    %v236 = vpop.f32.mrf.mxu0
    %v237 = vadd.f32 0.0, %v236
    %238 = vmatmul.bf16.gmra.mxu0 %v173
    %v239 = vpop.f32.mrf.mxu0
    %v240 = vadd.f32 0.0, %v239
    %v241 = vpop.f32.mrf.mxu0
    %v242 = vadd.f32 0.0, %v241
    %243 = vmatmul.bf16.gmra.mxu0 %v176
    %v244 = vpop.f32.mrf.mxu0
    %v245 = vadd.f32 0.0, %v244
    %v246 = vpop.f32.mrf.mxu0
    %v247 = vadd.f32 0.0, %v246
    %248 = vmatmul.bf16.gmra.mxu0 %v179
    %v249 = vpop.f32.mrf.mxu0
    %v250 = vadd.f32 0.0, %v249
    %v251 = vpop.f32.mrf.mxu0
    %v252 = vadd.f32 0.0, %v251
    %253 = vdwg.mxu0
    %254 = vmatpush.bf16.msra.mxu0 0
    %255 = vmatpush.bf16.msra.mxu0 0
    %256 = vmatpush.bf16.msra.mxu0 0
    %257 = vmatpush.bf16.msra.mxu0 0
    %258 = vmatpush.bf16.msra.mxu0 %v191
    %259 = vmatpush.bf16.msra.mxu0 %v150
    %260 = vmatpush.bf16.msra.mxu0 %v146
    %261 = vmatpush.bf16.msra.mxu0 %v142
    %262 = vmatmul.bf16.gmra.mxu0 %v170
    %v263 = vpop.f32.mrf.mxu0
    %v264 = vadd.f32 0.0, %v263
    %v265 = vpop.f32.mrf.mxu0
    %v266 = vadd.f32 0.0, %v265
    %267 = vmatmul.bf16.gmra.mxu0 %v173
    %v268 = vpop.f32.mrf.mxu0
    %v269 = vadd.f32 0.0, %v268
    %v270 = vpop.f32.mrf.mxu0
    %v271 = vadd.f32 0.0, %v270
    %272 = vmatmul.bf16.gmra.mxu0 %v176
    %v273 = vpop.f32.mrf.mxu0
    %v274 = vadd.f32 0.0, %v273
    %v275 = vpop.f32.mrf.mxu0
    %v276 = vadd.f32 0.0, %v275
    %277 = vmatmul.bf16.gmra.mxu0 %v179
    %v278 = vpop.f32.mrf.mxu0
    %v279 = vadd.f32 0.0, %v278
    %v280 = vpop.f32.mrf.mxu0
    %v281 = vadd.f32 0.0, %v280
    %282 = vdwg.mxu0
    %283 = vmatpush.bf16.msra.mxu0 0
    %284 = vmatpush.bf16.msra.mxu0 0
    %285 = vmatpush.bf16.msra.mxu0 0
    %286 = vmatpush.bf16.msra.mxu0 0
    %287 = vmatpush.bf16.msra.mxu0 %v194
    %288 = vmatpush.bf16.msra.mxu0 %v151
    %289 = vmatpush.bf16.msra.mxu0 %v147
    %290 = vmatpush.bf16.msra.mxu0 %v143
    %291 = vmatmul.bf16.gmra.mxu0 %v170
    %v292 = vpop.f32.mrf.mxu0
    %v293 = vadd.f32 0.0, %v292
    %v294 = vpop.f32.mrf.mxu0
    %v295 = vadd.f32 0.0, %v294
    %296 = vmatmul.bf16.gmra.mxu0 %v173
    %v297 = vpop.f32.mrf.mxu0
    %v298 = vadd.f32 0.0, %v297
    %v299 = vpop.f32.mrf.mxu0
    %v300 = vadd.f32 0.0, %v299
    %301 = vmatmul.bf16.gmra.mxu0 %v176
    %v302 = vpop.f32.mrf.mxu0
    %v303 = vadd.f32 0.0, %v302
    %v304 = vpop.f32.mrf.mxu0
    %v305 = vadd.f32 0.0, %v304
    %306 = vmatmul.bf16.gmra.mxu0 %v179
    %v307 = vpop.f32.mrf.mxu0
    %v308 = vadd.f32 0.0, %v307
    %v309 = vpop.f32.mrf.mxu0
    %v310 = vadd.f32 0.0, %v309
    %311 = vdwg.mxu0
    %v312 = vld [vmem:[#allocation2] sm:$0xff]
    %v313 = vld [vmem:[#allocation2 + $0x8] sm:$0xff]
    %v314 = vld [vmem:[#allocation2 + $0x10] sm:$0xff]
    %v315 = vld [vmem:[#allocation2 + $0x18] sm:$0xff]
    %v316 = vld [vmem:[#allocation2 + $0x20] sm:$0xff]
    %v317 = vld [vmem:[#allocation2 + $0x28] sm:$0xff]
    %v318 = vld [vmem:[#allocation2 + $0x30] sm:$0xff]
    %v319 = vld [vmem:[#allocation2 + $0x38] sm:$0xff]
    %v320 = vld [vmem:[#allocation2 + $0x40] sm:$0xff]
    %v321 = vld [vmem:[#allocation2 + $0x48] sm:$0xff]
    %v322 = vld [vmem:[#allocation2 + $0x50] sm:$0xff]
    %v323 = vld [vmem:[#allocation2 + $0x58] sm:$0xff]
    %v324 = vld [vmem:[#allocation2 + $0x60] sm:$0xff]
    %v325 = vld [vmem:[#allocation2 + $0x68] sm:$0xff]
    %v326 = vld [vmem:[#allocation2 + $0x70] sm:$0xff]
    %v327 = vld [vmem:[#allocation2 + $0x78] sm:$0xff]
    %v328 = vld [vmem:[#allocation2 + $0x80] sm:$0xff]
    %v329 = vld [vmem:[#allocation2 + $0x88] sm:$0xff]
    %v330 = vld [vmem:[#allocation2 + $0x90] sm:$0xff]
    %v331 = vld [vmem:[#allocation2 + $0x98] sm:$0xff]
    %v332 = vld [vmem:[#allocation2 + $0xa0] sm:$0xff]
    %v333 = vld [vmem:[#allocation2 + $0xa8] sm:$0xff]
    %v334 = vld [vmem:[#allocation2 + $0xb0] sm:$0xff]
    %v335 = vld [vmem:[#allocation2 + $0xb8] sm:$0xff]
    %v336 = vld [vmem:[#allocation2 + $0xc0] sm:$0xff]
    %v337 = vld [vmem:[#allocation2 + $0xc8] sm:$0xff]
    %v338 = vld [vmem:[#allocation2 + $0xd0] sm:$0xff]
    %v339 = vld [vmem:[#allocation2 + $0xd8] sm:$0xff]
    %v340 = vld [vmem:[#allocation2 + $0xe0] sm:$0xff]
    %v341 = vld [vmem:[#allocation2 + $0xe8] sm:$0xff]
    %v342 = vld [vmem:[#allocation2 + $0xf0] sm:$0xff]
    %v343 = vld [vmem:[#allocation2 + $0xf8] sm:$0xff]
    %v376 = vunpack.c.l.b16 %v312
    %v377 = vunpack.c.h.b16 %v312
    %v378 = vunpack.c.l.b16 %v313
    %v379 = vunpack.c.h.b16 %v313
    %v380 = vunpack.c.l.b16 %v314
    %v381 = vunpack.c.h.b16 %v314
    %v382 = vunpack.c.l.b16 %v315
    %v383 = vunpack.c.h.b16 %v315
    %v384 = vunpack.c.l.b16 %v316
    %v385 = vunpack.c.h.b16 %v316
    %v386 = vunpack.c.l.b16 %v317
    %v387 = vunpack.c.h.b16 %v317
    %v388 = vunpack.c.l.b16 %v318
    %v389 = vunpack.c.h.b16 %v318
    %v390 = vunpack.c.l.b16 %v319
    %v391 = vunpack.c.h.b16 %v319
    %v392 = vunpack.c.l.b16 %v320
    %v393 = vunpack.c.h.b16 %v320
    %v394 = vunpack.c.l.b16 %v321
    %v395 = vunpack.c.h.b16 %v321
    %v396 = vunpack.c.l.b16 %v322
    %v397 = vunpack.c.h.b16 %v322
    %v398 = vunpack.c.l.b16 %v323
    %v399 = vunpack.c.h.b16 %v323
    %v400 = vunpack.c.l.b16 %v324
    %v401 = vunpack.c.h.b16 %v324
    %v402 = vunpack.c.l.b16 %v325
    %v403 = vunpack.c.h.b16 %v325
    %v404 = vunpack.c.l.b16 %v326
    %v405 = vunpack.c.h.b16 %v326
    %v406 = vunpack.c.l.b16 %v327
    %v407 = vunpack.c.h.b16 %v327
    %v408 = vunpack.c.l.b16 %v328
    %v409 = vunpack.c.h.b16 %v328
    %v410 = vunpack.c.l.b16 %v329
    %v411 = vunpack.c.h.b16 %v329
    %v412 = vunpack.c.l.b16 %v330
    %v413 = vunpack.c.h.b16 %v330
    %v414 = vunpack.c.l.b16 %v331
    %v415 = vunpack.c.h.b16 %v331
    %v416 = vunpack.c.l.b16 %v332
    %v417 = vunpack.c.h.b16 %v332
    %v418 = vunpack.c.l.b16 %v333
    %v419 = vunpack.c.h.b16 %v333
    %v420 = vunpack.c.l.b16 %v334
    %v421 = vunpack.c.h.b16 %v334
    %v422 = vunpack.c.l.b16 %v335
    %v423 = vunpack.c.h.b16 %v335
    %v424 = vunpack.c.l.b16 %v336
    %v425 = vunpack.c.h.b16 %v336
    %v426 = vunpack.c.l.b16 %v337
    %v427 = vunpack.c.h.b16 %v337
    %v428 = vunpack.c.l.b16 %v338
    %v429 = vunpack.c.h.b16 %v338
    %v430 = vunpack.c.l.b16 %v339
    %v431 = vunpack.c.h.b16 %v339
    %v432 = vunpack.c.l.b16 %v340
    %v433 = vunpack.c.h.b16 %v340
    %v434 = vunpack.c.l.b16 %v341
    %v435 = vunpack.c.h.b16 %v341
    %v436 = vunpack.c.l.b16 %v342
    %v437 = vunpack.c.h.b16 %v342
    %v438 = vunpack.c.l.b16 %v343
    %v439 = vunpack.c.h.b16 %v343
    %v440 = vpack.c.b16 %v380, %v376
    %v441 = vpack.c.b16 %v381, %v377
    %v442 = vpack.c.b16 %v382, %v378
    %v443 = vpack.c.b16 %v383, %v379
    %v444 = vpack.c.b16 %v388, %v384
    %v445 = vpack.c.b16 %v389, %v385
    %v446 = vpack.c.b16 %v390, %v386
    %v447 = vpack.c.b16 %v391, %v387
    %v448 = vpack.c.b16 %v396, %v392
    %v449 = vpack.c.b16 %v397, %v393
    %v450 = vpack.c.b16 %v398, %v394
    %v451 = vpack.c.b16 %v399, %v395
    %v452 = vpack.c.b16 %v404, %v400
    %v453 = vpack.c.b16 %v405, %v401
    %v454 = vpack.c.b16 %v406, %v402
    %v455 = vpack.c.b16 %v407, %v403
    %v456 = vpack.c.b16 %v412, %v408
    %v457 = vpack.c.b16 %v413, %v409
    %v458 = vpack.c.b16 %v414, %v410
    %v459 = vpack.c.b16 %v415, %v411
    %v460 = vpack.c.b16 %v420, %v416
    %v461 = vpack.c.b16 %v421, %v417
    %v462 = vpack.c.b16 %v422, %v418
    %v463 = vpack.c.b16 %v423, %v419
    %v464 = vpack.c.b16 %v428, %v424
    %v465 = vpack.c.b16 %v429, %v425
    %v466 = vpack.c.b16 %v430, %v426
    %v467 = vpack.c.b16 %v431, %v427
    %v468 = vpack.c.b16 %v436, %v432
    %v469 = vpack.c.b16 %v437, %v433
    %v470 = vpack.c.b16 %v438, %v434
    %v471 = vpack.c.b16 %v439, %v435
    %504 = vmatpush.bf16.msra.mxu0 %v468
    %505 = vmatpush.bf16.msra.mxu0 %v464
    %506 = vmatpush.bf16.msra.mxu0 %v460
    %507 = vmatpush.bf16.msra.mxu0 %v456
    %508 = vmatpush.bf16.msra.mxu0 %v452
    %509 = vmatpush.bf16.msra.mxu0 %v448
    %510 = vmatpush.bf16.msra.mxu0 %v444
    %511 = vmatpush.bf16.msra.mxu0 %v440
    %512 = vmatmul.bf16.gmra.mxu0 0
    %v513 = vpop.f32.mrf.mxu0
    %v514 = vadd.f32 0.0, %v513
    %v515 = vpop.f32.mrf.mxu0
    %516 = vdwg.mxu0
    %517 = vmatpush.bf16.msra.mxu0 %v469
    %518 = vmatpush.bf16.msra.mxu0 %v465
    %519 = vmatpush.bf16.msra.mxu0 %v461
    %520 = vmatpush.bf16.msra.mxu0 %v457
    %521 = vmatpush.bf16.msra.mxu0 %v453
    %522 = vmatpush.bf16.msra.mxu0 %v449
    %523 = vmatpush.bf16.msra.mxu0 %v445
    %524 = vmatpush.bf16.msra.mxu0 %v441
    %525 = vmatmul.bf16.gmra.mxu0 0
    %v526 = vpop.f32.mrf.mxu0
    %v527 = vadd.f32 0.0, %v526
    %v528 = vpop.f32.mrf.mxu0
    %529 = vdwg.mxu0
    %530 = vmatpush.bf16.msra.mxu0 %v470
    %531 = vmatpush.bf16.msra.mxu0 %v466
    %532 = vmatpush.bf16.msra.mxu0 %v462
    %533 = vmatpush.bf16.msra.mxu0 %v458
    %534 = vmatpush.bf16.msra.mxu0 %v454
    %535 = vmatpush.bf16.msra.mxu0 %v450
    %536 = vmatpush.bf16.msra.mxu0 %v446
    %537 = vmatpush.bf16.msra.mxu0 %v442
    %538 = vmatmul.bf16.gmra.mxu0 0
    %v539 = vpop.f32.mrf.mxu0
    %v540 = vadd.f32 0.0, %v539
    %v541 = vpop.f32.mrf.mxu0
    %542 = vdwg.mxu0
    %543 = vmatpush.bf16.msra.mxu0 %v471
    %544 = vmatpush.bf16.msra.mxu0 %v467
    %545 = vmatpush.bf16.msra.mxu0 %v463
    %546 = vmatpush.bf16.msra.mxu0 %v459
    %547 = vmatpush.bf16.msra.mxu0 %v455
    %548 = vmatpush.bf16.msra.mxu0 %v451
    %549 = vmatpush.bf16.msra.mxu0 %v447
    %550 = vmatpush.bf16.msra.mxu0 %v443
    %551 = vmatmul.bf16.gmra.mxu0 0
    %v552 = vpop.f32.mrf.mxu0
    %v553 = vadd.f32 0.0, %v552
    %v554 = vpop.f32.mrf.mxu0
    %555 = vdwg.mxu0
    %v556 = vadd.f32 %v206, %v514
    %v557 = vadd.f32 %v235, %v527
    %v558 = vadd.f32 %v264, %v540
    %v559 = vadd.f32 %v293, %v553
    %v560 = vxor.u32 %v556, 2147483648
    %v561 = vxor.u32 %v557, 2147483648
    %v562 = vxor.u32 %v558, 2147483648
    %v563 = vmul.f32 %v560, 1.442695
    %v564 = vpow.pop %v563
    %v565 = vmul.f32 %v561, 1.442695
    %v566 = vpow.pop %v565
    %v567 = vmul.f32 %v562, 1.442695
    %v568 = vpow.pop %v567
    %v569 = vadd.f32 %v564, 1.0
    %v570 = vadd.f32 %v566, 1.0
    %v571 = vadd.f32 %v568, 1.0
    %v572 = vrcp.pop %v569
    %v573 = vmul.f32 %v569, %v572
    %v574 = vsub.f32 1.0, %v573
    %v575 = vmul.f32 %v572, %v574
    %v576 = vadd.f32 %v572, %v575
    %vm577 = vweird.f32 %v569
    %vm578 = vweird.f32 %v572
    %vm579 = vmor %vm577, %vm578
    %v580 = vsel %vm579, %v572, %v576
    %v581 = vand.u32 2147483647, %v569
    %vm582 = vcmp.eq.f32.partialorder %v581, 8.507059e+37
    %v583 = vand.u32 %v569, 2147483648
    %v584 = vor.u32 1.1754944e-38, %v583
    %v585 = vsel %vm582, %v584, %v580
    %v586 = vmul.f32 1.0, %v585
    %v587 = vrcp.pop %v570
    %v588 = vmul.f32 %v570, %v587
    %v589 = vsub.f32 1.0, %v588
    %v590 = vmul.f32 %v587, %v589
    %v591 = vadd.f32 %v587, %v590
    %vm592 = vweird.f32 %v570
    %vm593 = vweird.f32 %v587
    %vm594 = vmor %vm592, %vm593
    %v595 = vsel %vm594, %v587, %v591
    %v596 = vand.u32 2147483647, %v570
    %vm597 = vcmp.eq.f32.partialorder %v596, 8.507059e+37
    %v598 = vand.u32 %v570, 2147483648
    %v599 = vor.u32 1.1754944e-38, %v598
    %v600 = vsel %vm597, %v599, %v595
    %v601 = vmul.f32 1.0, %v600
    %v602 = vrcp.pop %v571
    %v603 = vmul.f32 %v571, %v602
    %v604 = vsub.f32 1.0, %v603
    %v605 = vmul.f32 %v602, %v604
    %v606 = vadd.f32 %v602, %v605
    %vm607 = vweird.f32 %v571
    %vm608 = vweird.f32 %v602
    %vm609 = vmor %vm607, %vm608
    %v610 = vsel %vm609, %v602, %v606
    %v611 = vand.u32 2147483647, %v571
    %vm612 = vcmp.eq.f32.partialorder %v611, 8.507059e+37
    %v613 = vand.u32 %v571, 2147483648
    %v614 = vor.u32 1.1754944e-38, %v613
    %v615 = vsel %vm612, %v614, %v610
    %v616 = vmul.f32 1.0, %v615
    %v617 = vtanh.pop %v559
    %v618 = vmul.f32 %v601, 0.0
    %v619 = vmul.f32 %v586, %v617
    %v620 = vadd.f32 %v618, %v619
    %v621 = vtanh.pop %v620
    %v622 = vmul.f32 %v616, %v621
    %v623 = vpack.c.bf16 %v622, %v622
    %624 = vmatpush.bf16.msra.mxu0 %v468
    %625 = vmatpush.bf16.msra.mxu0 %v464
    %626 = vmatpush.bf16.msra.mxu0 %v460
    %627 = vmatpush.bf16.msra.mxu0 %v456
    %628 = vmatpush.bf16.msra.mxu0 %v452
    %629 = vmatpush.bf16.msra.mxu0 %v448
    %630 = vmatpush.bf16.msra.mxu0 %v444
    %631 = vmatpush.bf16.msra.mxu0 %v440
    %632 = vmatmul.bf16.gmra.mxu0 %v623
    %v633 = vpop.f32.mrf.mxu0
    %v634 = vadd.f32 0.0, %v633
    %v635 = vpop.f32.mrf.mxu0
    %636 = vdwg.mxu0
    %637 = vmatpush.bf16.msra.mxu0 %v469
    %638 = vmatpush.bf16.msra.mxu0 %v465
    %639 = vmatpush.bf16.msra.mxu0 %v461
    %640 = vmatpush.bf16.msra.mxu0 %v457
    %641 = vmatpush.bf16.msra.mxu0 %v453
    %642 = vmatpush.bf16.msra.mxu0 %v449
    %643 = vmatpush.bf16.msra.mxu0 %v445
    %644 = vmatpush.bf16.msra.mxu0 %v441
    %645 = vmatmul.bf16.gmra.mxu0 %v623
    %v646 = vpop.f32.mrf.mxu0
    %v647 = vadd.f32 0.0, %v646
    %v648 = vpop.f32.mrf.mxu0
    %649 = vdwg.mxu0
    %650 = vmatpush.bf16.msra.mxu0 %v470
    %651 = vmatpush.bf16.msra.mxu0 %v466
    %652 = vmatpush.bf16.msra.mxu0 %v462
    %653 = vmatpush.bf16.msra.mxu0 %v458
    %654 = vmatpush.bf16.msra.mxu0 %v454
    %655 = vmatpush.bf16.msra.mxu0 %v450
    %656 = vmatpush.bf16.msra.mxu0 %v446
    %657 = vmatpush.bf16.msra.mxu0 %v442
    %658 = vmatmul.bf16.gmra.mxu0 %v623
    %v659 = vpop.f32.mrf.mxu0
    %v660 = vadd.f32 0.0, %v659
    %v661 = vpop.f32.mrf.mxu0
    %662 = vdwg.mxu0
    %663 = vmatpush.bf16.msra.mxu0 %v471
    %664 = vmatpush.bf16.msra.mxu0 %v467
    %665 = vmatpush.bf16.msra.mxu0 %v463
    %666 = vmatpush.bf16.msra.mxu0 %v459
    %667 = vmatpush.bf16.msra.mxu0 %v455
    %668 = vmatpush.bf16.msra.mxu0 %v451
    %669 = vmatpush.bf16.msra.mxu0 %v447
    %670 = vmatpush.bf16.msra.mxu0 %v443
    %671 = vmatmul.bf16.gmra.mxu0 %v623
    %v672 = vpop.f32.mrf.mxu0
    %v673 = vadd.f32 0.0, %v672
    %v674 = vpop.f32.mrf.mxu0
    %675 = vdwg.mxu0
    %v676 = vadd.f32 %v208, %v634
    %v677 = vadd.f32 %v237, %v647
    %v678 = vadd.f32 %v266, %v660
    %v679 = vadd.f32 %v295, %v673
    %v680 = vxor.u32 %v676, 2147483648
    %v681 = vxor.u32 %v677, 2147483648
    %v682 = vxor.u32 %v678, 2147483648
    %v683 = vmul.f32 %v680, 1.442695
    %v684 = vpow.pop %v683
    %v685 = vmul.f32 %v681, 1.442695
    %v686 = vpow.pop %v685
    %v687 = vmul.f32 %v682, 1.442695
    %v688 = vpow.pop %v687
    %v689 = vadd.f32 %v684, 1.0
    %v690 = vadd.f32 %v686, 1.0
    %v691 = vadd.f32 %v688, 1.0
    %v692 = vrcp.pop %v689
    %v693 = vmul.f32 %v689, %v692
    %v694 = vsub.f32 1.0, %v693
    %v695 = vmul.f32 %v692, %v694
    %v696 = vadd.f32 %v692, %v695
    %vm697 = vweird.f32 %v689
    %vm698 = vweird.f32 %v692
    %vm699 = vmor %vm697, %vm698
    %v700 = vsel %vm699, %v692, %v696
    %v701 = vand.u32 2147483647, %v689
    %vm702 = vcmp.eq.f32.partialorder %v701, 8.507059e+37
    %v703 = vand.u32 %v689, 2147483648
    %v704 = vor.u32 1.1754944e-38, %v703
    %v705 = vsel %vm702, %v704, %v700
    %v706 = vmul.f32 1.0, %v705
    %v707 = vrcp.pop %v690
    %v708 = vmul.f32 %v690, %v707
    %v709 = vsub.f32 1.0, %v708
    %v710 = vmul.f32 %v707, %v709
    %v711 = vadd.f32 %v707, %v710
    %vm712 = vweird.f32 %v690
    %vm713 = vweird.f32 %v707
    %vm714 = vmor %vm712, %vm713
    %v715 = vsel %vm714, %v707, %v711
    %v716 = vand.u32 2147483647, %v690
    %vm717 = vcmp.eq.f32.partialorder %v716, 8.507059e+37
    %v718 = vand.u32 %v690, 2147483648
    %v719 = vor.u32 1.1754944e-38, %v718
    %v720 = vsel %vm717, %v719, %v715
    %v721 = vmul.f32 1.0, %v720
    %v722 = vrcp.pop %v691
    %v723 = vmul.f32 %v691, %v722
    %v724 = vsub.f32 1.0, %v723
    %v725 = vmul.f32 %v722, %v724
    %v726 = vadd.f32 %v722, %v725
    %vm727 = vweird.f32 %v691
    %vm728 = vweird.f32 %v722
    %vm729 = vmor %vm727, %vm728
    %v730 = vsel %vm729, %v722, %v726
    %v731 = vand.u32 2147483647, %v691
    %vm732 = vcmp.eq.f32.partialorder %v731, 8.507059e+37
    %v733 = vand.u32 %v691, 2147483648
    %v734 = vor.u32 1.1754944e-38, %v733
    %v735 = vsel %vm732, %v734, %v730
    %v736 = vmul.f32 1.0, %v735
    %v737 = vtanh.pop %v679
    %v738 = vmul.f32 %v721, %v620
    %v739 = vmul.f32 %v706, %v737
    %v740 = vadd.f32 %v738, %v739
    %v741 = vtanh.pop %v740
    %v742 = vmul.f32 %v736, %v741
    %v743 = vpack.c.bf16 %v742, %v742
    %744 = vmatpush.bf16.msra.mxu0 %v468
    %745 = vmatpush.bf16.msra.mxu0 %v464
    %746 = vmatpush.bf16.msra.mxu0 %v460
    %747 = vmatpush.bf16.msra.mxu0 %v456
    %748 = vmatpush.bf16.msra.mxu0 %v452
    %749 = vmatpush.bf16.msra.mxu0 %v448
    %750 = vmatpush.bf16.msra.mxu0 %v444
    %751 = vmatpush.bf16.msra.mxu0 %v440
    %752 = vmatmul.bf16.gmra.mxu0 %v743
    %v753 = vpop.f32.mrf.mxu0
    %v754 = vadd.f32 0.0, %v753
    %v755 = vpop.f32.mrf.mxu0
    %756 = vdwg.mxu0
    %757 = vmatpush.bf16.msra.mxu0 %v469
    %758 = vmatpush.bf16.msra.mxu0 %v465
    %759 = vmatpush.bf16.msra.mxu0 %v461
    %760 = vmatpush.bf16.msra.mxu0 %v457
    %761 = vmatpush.bf16.msra.mxu0 %v453
    %762 = vmatpush.bf16.msra.mxu0 %v449
    %763 = vmatpush.bf16.msra.mxu0 %v445
    %764 = vmatpush.bf16.msra.mxu0 %v441
    %765 = vmatmul.bf16.gmra.mxu0 %v743
    %v766 = vpop.f32.mrf.mxu0
    %v767 = vadd.f32 0.0, %v766
    %v768 = vpop.f32.mrf.mxu0
    %769 = vdwg.mxu0
    %770 = vmatpush.bf16.msra.mxu0 %v470
    %771 = vmatpush.bf16.msra.mxu0 %v466
    %772 = vmatpush.bf16.msra.mxu0 %v462
    %773 = vmatpush.bf16.msra.mxu0 %v458
    %774 = vmatpush.bf16.msra.mxu0 %v454
    %775 = vmatpush.bf16.msra.mxu0 %v450
    %776 = vmatpush.bf16.msra.mxu0 %v446
    %777 = vmatpush.bf16.msra.mxu0 %v442
    %778 = vmatmul.bf16.gmra.mxu0 %v743
    %v779 = vpop.f32.mrf.mxu0
    %v780 = vadd.f32 0.0, %v779
    %v781 = vpop.f32.mrf.mxu0
    %782 = vdwg.mxu0
    %783 = vmatpush.bf16.msra.mxu0 %v471
    %784 = vmatpush.bf16.msra.mxu0 %v467
    %785 = vmatpush.bf16.msra.mxu0 %v463
    %786 = vmatpush.bf16.msra.mxu0 %v459
    %787 = vmatpush.bf16.msra.mxu0 %v455
    %788 = vmatpush.bf16.msra.mxu0 %v451
    %789 = vmatpush.bf16.msra.mxu0 %v447
    %790 = vmatpush.bf16.msra.mxu0 %v443
    %791 = vmatmul.bf16.gmra.mxu0 %v743
    %v792 = vpop.f32.mrf.mxu0
    %v793 = vadd.f32 0.0, %v792
    %v794 = vpop.f32.mrf.mxu0
    %795 = vdwg.mxu0
    %v796 = vadd.f32 %v211, %v754
    %v797 = vadd.f32 %v240, %v767
    %v798 = vadd.f32 %v269, %v780
    %v799 = vadd.f32 %v298, %v793
    %v800 = vxor.u32 %v796, 2147483648
    %v801 = vxor.u32 %v797, 2147483648
    %v802 = vxor.u32 %v798, 2147483648
    %v803 = vmul.f32 %v800, 1.442695
    %v804 = vpow.pop %v803
    %v805 = vmul.f32 %v801, 1.442695
    %v806 = vpow.pop %v805
    %v807 = vmul.f32 %v802, 1.442695
    %v808 = vpow.pop %v807
    %v809 = vadd.f32 %v804, 1.0
    %v810 = vadd.f32 %v806, 1.0
    %v811 = vadd.f32 %v808, 1.0
    %v812 = vrcp.pop %v809
    %v813 = vmul.f32 %v809, %v812
    %v814 = vsub.f32 1.0, %v813
    %v815 = vmul.f32 %v812, %v814
    %v816 = vadd.f32 %v812, %v815
    %vm817 = vweird.f32 %v809
    %vm818 = vweird.f32 %v812
    %vm819 = vmor %vm817, %vm818
    %v820 = vsel %vm819, %v812, %v816
    %v821 = vand.u32 2147483647, %v809
    %vm822 = vcmp.eq.f32.partialorder %v821, 8.507059e+37
    %v823 = vand.u32 %v809, 2147483648
    %v824 = vor.u32 1.1754944e-38, %v823
    %v825 = vsel %vm822, %v824, %v820
    %v826 = vmul.f32 1.0, %v825
    %v827 = vrcp.pop %v810
    %v828 = vmul.f32 %v810, %v827
    %v829 = vsub.f32 1.0, %v828
    %v830 = vmul.f32 %v827, %v829
    %v831 = vadd.f32 %v827, %v830
    %vm832 = vweird.f32 %v810
    %vm833 = vweird.f32 %v827
    %vm834 = vmor %vm832, %vm833
    %v835 = vsel %vm834, %v827, %v831
    %v836 = vand.u32 2147483647, %v810
    %vm837 = vcmp.eq.f32.partialorder %v836, 8.507059e+37
    %v838 = vand.u32 %v810, 2147483648
    %v839 = vor.u32 1.1754944e-38, %v838
    %v840 = vsel %vm837, %v839, %v835
    %v841 = vmul.f32 1.0, %v840
    %v842 = vrcp.pop %v811
    %v843 = vmul.f32 %v811, %v842
    %v844 = vsub.f32 1.0, %v843
    %v845 = vmul.f32 %v842, %v844
    %v846 = vadd.f32 %v842, %v845
    %vm847 = vweird.f32 %v811
    %vm848 = vweird.f32 %v842
    %vm849 = vmor %vm847, %vm848
    %v850 = vsel %vm849, %v842, %v846
    %v851 = vand.u32 2147483647, %v811
    %vm852 = vcmp.eq.f32.partialorder %v851, 8.507059e+37
    %v853 = vand.u32 %v811, 2147483648
    %v854 = vor.u32 1.1754944e-38, %v853
    %v855 = vsel %vm852, %v854, %v850
    %v856 = vmul.f32 1.0, %v855
    %v857 = vtanh.pop %v799
    %v858 = vmul.f32 %v841, %v740
    %v859 = vmul.f32 %v826, %v857
    %v860 = vadd.f32 %v858, %v859
    %v861 = vtanh.pop %v860
    %v862 = vmul.f32 %v856, %v861
    %v863 = vpack.c.bf16 %v862, %v862
    %864 = vmatpush.bf16.msra.mxu0 %v468
    %865 = vmatpush.bf16.msra.mxu0 %v464
    %866 = vmatpush.bf16.msra.mxu0 %v460
    %867 = vmatpush.bf16.msra.mxu0 %v456
    %868 = vmatpush.bf16.msra.mxu0 %v452
    %869 = vmatpush.bf16.msra.mxu0 %v448
    %870 = vmatpush.bf16.msra.mxu0 %v444
    %871 = vmatpush.bf16.msra.mxu0 %v440
    %872 = vmatmul.bf16.gmra.mxu0 %v863
    %v873 = vpop.f32.mrf.mxu0
    %v874 = vadd.f32 0.0, %v873
    %v875 = vpop.f32.mrf.mxu0
    %876 = vdwg.mxu0
    %877 = vmatpush.bf16.msra.mxu0 %v469
    %878 = vmatpush.bf16.msra.mxu0 %v465
    %879 = vmatpush.bf16.msra.mxu0 %v461
    %880 = vmatpush.bf16.msra.mxu0 %v457
    %881 = vmatpush.bf16.msra.mxu0 %v453
    %882 = vmatpush.bf16.msra.mxu0 %v449
    %883 = vmatpush.bf16.msra.mxu0 %v445
    %884 = vmatpush.bf16.msra.mxu0 %v441
    %885 = vmatmul.bf16.gmra.mxu0 %v863
    %v886 = vpop.f32.mrf.mxu0
    %v887 = vadd.f32 0.0, %v886
    %v888 = vpop.f32.mrf.mxu0
    %889 = vdwg.mxu0
    %890 = vmatpush.bf16.msra.mxu0 %v470
    %891 = vmatpush.bf16.msra.mxu0 %v466
    %892 = vmatpush.bf16.msra.mxu0 %v462
    %893 = vmatpush.bf16.msra.mxu0 %v458
    %894 = vmatpush.bf16.msra.mxu0 %v454
    %895 = vmatpush.bf16.msra.mxu0 %v450
    %896 = vmatpush.bf16.msra.mxu0 %v446
    %897 = vmatpush.bf16.msra.mxu0 %v442
    %898 = vmatmul.bf16.gmra.mxu0 %v863
    %v899 = vpop.f32.mrf.mxu0
    %v900 = vadd.f32 0.0, %v899
    %v901 = vpop.f32.mrf.mxu0
    %902 = vdwg.mxu0
    %903 = vmatpush.bf16.msra.mxu0 %v471
    %904 = vmatpush.bf16.msra.mxu0 %v467
    %905 = vmatpush.bf16.msra.mxu0 %v463
    %906 = vmatpush.bf16.msra.mxu0 %v459
    %907 = vmatpush.bf16.msra.mxu0 %v455
    %908 = vmatpush.bf16.msra.mxu0 %v451
    %909 = vmatpush.bf16.msra.mxu0 %v447
    %910 = vmatpush.bf16.msra.mxu0 %v443
    %911 = vmatmul.bf16.gmra.mxu0 %v863
    %v912 = vpop.f32.mrf.mxu0
    %v913 = vadd.f32 0.0, %v912
    %v914 = vpop.f32.mrf.mxu0
    %915 = vdwg.mxu0
    %v916 = vadd.f32 %v213, %v874
    %v917 = vadd.f32 %v242, %v887
    %v918 = vadd.f32 %v271, %v900
    %v919 = vadd.f32 %v300, %v913
    %v920 = vxor.u32 %v916, 2147483648
    %v921 = vxor.u32 %v917, 2147483648
    %v922 = vxor.u32 %v918, 2147483648
    %v923 = vmul.f32 %v920, 1.442695
    %v924 = vpow.pop %v923
    %v925 = vmul.f32 %v921, 1.442695
    %v926 = vpow.pop %v925
    %v927 = vmul.f32 %v922, 1.442695
    %v928 = vpow.pop %v927
    %v929 = vadd.f32 %v924, 1.0
    %v930 = vadd.f32 %v926, 1.0
    %v931 = vadd.f32 %v928, 1.0
    %v932 = vrcp.pop %v929
    %v933 = vmul.f32 %v929, %v932
    %v934 = vsub.f32 1.0, %v933
    %v935 = vmul.f32 %v932, %v934
    %v936 = vadd.f32 %v932, %v935
    %vm937 = vweird.f32 %v929
    %vm938 = vweird.f32 %v932
    %vm939 = vmor %vm937, %vm938
    %v940 = vsel %vm939, %v932, %v936
    %v941 = vand.u32 2147483647, %v929
    %vm942 = vcmp.eq.f32.partialorder %v941, 8.507059e+37
    %v943 = vand.u32 %v929, 2147483648
    %v944 = vor.u32 1.1754944e-38, %v943
    %v945 = vsel %vm942, %v944, %v940
    %v946 = vmul.f32 1.0, %v945
    %v947 = vrcp.pop %v930
    %v948 = vmul.f32 %v930, %v947
    %v949 = vsub.f32 1.0, %v948
    %v950 = vmul.f32 %v947, %v949
    %v951 = vadd.f32 %v947, %v950
    %vm952 = vweird.f32 %v930
    %vm953 = vweird.f32 %v947
    %vm954 = vmor %vm952, %vm953
    %v955 = vsel %vm954, %v947, %v951
    %v956 = vand.u32 2147483647, %v930
    %vm957 = vcmp.eq.f32.partialorder %v956, 8.507059e+37
    %v958 = vand.u32 %v930, 2147483648
    %v959 = vor.u32 1.1754944e-38, %v958
    %v960 = vsel %vm957, %v959, %v955
    %v961 = vmul.f32 1.0, %v960
    %v962 = vrcp.pop %v931
    %v963 = vmul.f32 %v931, %v962
    %v964 = vsub.f32 1.0, %v963
    %v965 = vmul.f32 %v962, %v964
    %v966 = vadd.f32 %v962, %v965
    %vm967 = vweird.f32 %v931
    %vm968 = vweird.f32 %v962
    %vm969 = vmor %vm967, %vm968
    %v970 = vsel %vm969, %v962, %v966
    %v971 = vand.u32 2147483647, %v931
    %vm972 = vcmp.eq.f32.partialorder %v971, 8.507059e+37
    %v973 = vand.u32 %v931, 2147483648
    %v974 = vor.u32 1.1754944e-38, %v973
    %v975 = vsel %vm972, %v974, %v970
    %v976 = vmul.f32 1.0, %v975
    %v977 = vtanh.pop %v919
    %v978 = vmul.f32 %v961, %v860
    %v979 = vmul.f32 %v946, %v977
    %v980 = vadd.f32 %v978, %v979
    %v981 = vtanh.pop %v980
    %v982 = vmul.f32 %v976, %v981
    %v983 = vpack.c.bf16 %v982, %v982
    %984 = vmatpush.bf16.msra.mxu0 %v468
    %985 = vmatpush.bf16.msra.mxu0 %v464
    %986 = vmatpush.bf16.msra.mxu0 %v460
    %987 = vmatpush.bf16.msra.mxu0 %v456
    %988 = vmatpush.bf16.msra.mxu0 %v452
    %989 = vmatpush.bf16.msra.mxu0 %v448
    %990 = vmatpush.bf16.msra.mxu0 %v444
    %991 = vmatpush.bf16.msra.mxu0 %v440
    %992 = vmatmul.bf16.gmra.mxu0 %v983
    %v993 = vpop.f32.mrf.mxu0
    %v994 = vadd.f32 0.0, %v993
    %v995 = vpop.f32.mrf.mxu0
    %996 = vdwg.mxu0
    %997 = vmatpush.bf16.msra.mxu0 %v469
    %998 = vmatpush.bf16.msra.mxu0 %v465
    %999 = vmatpush.bf16.msra.mxu0 %v461
    %1000 = vmatpush.bf16.msra.mxu0 %v457
    %1001 = vmatpush.bf16.msra.mxu0 %v453
    %1002 = vmatpush.bf16.msra.mxu0 %v449
    %1003 = vmatpush.bf16.msra.mxu0 %v445
    %1004 = vmatpush.bf16.msra.mxu0 %v441
    %1005 = vmatmul.bf16.gmra.mxu0 %v983
    %v1006 = vpop.f32.mrf.mxu0
    %v1007 = vadd.f32 0.0, %v1006
    %v1008 = vpop.f32.mrf.mxu0
    %1009 = vdwg.mxu0
    %1010 = vmatpush.bf16.msra.mxu0 %v470
    %1011 = vmatpush.bf16.msra.mxu0 %v466
    %1012 = vmatpush.bf16.msra.mxu0 %v462
    %1013 = vmatpush.bf16.msra.mxu0 %v458
    %1014 = vmatpush.bf16.msra.mxu0 %v454
    %1015 = vmatpush.bf16.msra.mxu0 %v450
    %1016 = vmatpush.bf16.msra.mxu0 %v446
    %1017 = vmatpush.bf16.msra.mxu0 %v442
    %1018 = vmatmul.bf16.gmra.mxu0 %v983
    %v1019 = vpop.f32.mrf.mxu0
    %v1020 = vadd.f32 0.0, %v1019
    %v1021 = vpop.f32.mrf.mxu0
    %1022 = vdwg.mxu0
    %1023 = vmatpush.bf16.msra.mxu0 %v471
    %1024 = vmatpush.bf16.msra.mxu0 %v467
    %1025 = vmatpush.bf16.msra.mxu0 %v463
    %1026 = vmatpush.bf16.msra.mxu0 %v459
    %1027 = vmatpush.bf16.msra.mxu0 %v455
    %1028 = vmatpush.bf16.msra.mxu0 %v451
    %1029 = vmatpush.bf16.msra.mxu0 %v447
    %1030 = vmatpush.bf16.msra.mxu0 %v443
    %1031 = vmatmul.bf16.gmra.mxu0 %v983
    %v1032 = vpop.f32.mrf.mxu0
    %v1033 = vadd.f32 0.0, %v1032
    %v1034 = vpop.f32.mrf.mxu0
    %1035 = vdwg.mxu0
    %v1036 = vadd.f32 %v216, %v994
    %v1037 = vadd.f32 %v245, %v1007
    %v1038 = vadd.f32 %v274, %v1020
    %v1039 = vadd.f32 %v303, %v1033
    %v1040 = vxor.u32 %v1036, 2147483648
    %v1041 = vxor.u32 %v1037, 2147483648
    %v1042 = vxor.u32 %v1038, 2147483648
    %v1043 = vmul.f32 %v1040, 1.442695
    %v1044 = vpow.pop %v1043
    %v1045 = vmul.f32 %v1041, 1.442695
    %v1046 = vpow.pop %v1045
    %v1047 = vmul.f32 %v1042, 1.442695
    %v1048 = vpow.pop %v1047
    %v1049 = vadd.f32 %v1044, 1.0
    %v1050 = vadd.f32 %v1046, 1.0
    %v1051 = vadd.f32 %v1048, 1.0
    %v1052 = vrcp.pop %v1049
    %v1053 = vmul.f32 %v1049, %v1052
    %v1054 = vsub.f32 1.0, %v1053
    %v1055 = vmul.f32 %v1052, %v1054
    %v1056 = vadd.f32 %v1052, %v1055
    %vm1057 = vweird.f32 %v1049
    %vm1058 = vweird.f32 %v1052
    %vm1059 = vmor %vm1057, %vm1058
    %v1060 = vsel %vm1059, %v1052, %v1056
    %v1061 = vand.u32 2147483647, %v1049
    %vm1062 = vcmp.eq.f32.partialorder %v1061, 8.507059e+37
    %v1063 = vand.u32 %v1049, 2147483648
    %v1064 = vor.u32 1.1754944e-38, %v1063
    %v1065 = vsel %vm1062, %v1064, %v1060
    %v1066 = vmul.f32 1.0, %v1065
    %v1067 = vrcp.pop %v1050
    %v1068 = vmul.f32 %v1050, %v1067
    %v1069 = vsub.f32 1.0, %v1068
    %v1070 = vmul.f32 %v1067, %v1069
    %v1071 = vadd.f32 %v1067, %v1070
    %vm1072 = vweird.f32 %v1050
    %vm1073 = vweird.f32 %v1067
    %vm1074 = vmor %vm1072, %vm1073
    %v1075 = vsel %vm1074, %v1067, %v1071
    %v1076 = vand.u32 2147483647, %v1050
    %vm1077 = vcmp.eq.f32.partialorder %v1076, 8.507059e+37
    %v1078 = vand.u32 %v1050, 2147483648
    %v1079 = vor.u32 1.1754944e-38, %v1078
    %v1080 = vsel %vm1077, %v1079, %v1075
    %v1081 = vmul.f32 1.0, %v1080
    %v1082 = vrcp.pop %v1051
    %v1083 = vmul.f32 %v1051, %v1082
    %v1084 = vsub.f32 1.0, %v1083
    %v1085 = vmul.f32 %v1082, %v1084
    %v1086 = vadd.f32 %v1082, %v1085
    %vm1087 = vweird.f32 %v1051
    %vm1088 = vweird.f32 %v1082
    %vm1089 = vmor %vm1087, %vm1088
    %v1090 = vsel %vm1089, %v1082, %v1086
    %v1091 = vand.u32 2147483647, %v1051
    %vm1092 = vcmp.eq.f32.partialorder %v1091, 8.507059e+37
    %v1093 = vand.u32 %v1051, 2147483648
    %v1094 = vor.u32 1.1754944e-38, %v1093
    %v1095 = vsel %vm1092, %v1094, %v1090
    %v1096 = vmul.f32 1.0, %v1095
    %v1097 = vtanh.pop %v1039
    %v1098 = vmul.f32 %v1081, %v980
    %v1099 = vmul.f32 %v1066, %v1097
    %v1100 = vadd.f32 %v1098, %v1099
    %v1101 = vtanh.pop %v1100
    %v1102 = vmul.f32 %v1096, %v1101
    %v1103 = vpack.c.bf16 %v1102, %v1102
    %1104 = vmatpush.bf16.msra.mxu0 %v468
    %1105 = vmatpush.bf16.msra.mxu0 %v464
    %1106 = vmatpush.bf16.msra.mxu0 %v460
    %1107 = vmatpush.bf16.msra.mxu0 %v456
    %1108 = vmatpush.bf16.msra.mxu0 %v452
    %1109 = vmatpush.bf16.msra.mxu0 %v448
    %1110 = vmatpush.bf16.msra.mxu0 %v444
    %1111 = vmatpush.bf16.msra.mxu0 %v440
    %1112 = vmatmul.bf16.gmra.mxu0 %v1103
    %v1113 = vpop.f32.mrf.mxu0
    %v1114 = vadd.f32 0.0, %v1113
    %v1115 = vpop.f32.mrf.mxu0
    %1116 = vdwg.mxu0
    %1117 = vmatpush.bf16.msra.mxu0 %v469
    %1118 = vmatpush.bf16.msra.mxu0 %v465
    %1119 = vmatpush.bf16.msra.mxu0 %v461
    %1120 = vmatpush.bf16.msra.mxu0 %v457
    %1121 = vmatpush.bf16.msra.mxu0 %v453
    %1122 = vmatpush.bf16.msra.mxu0 %v449
    %1123 = vmatpush.bf16.msra.mxu0 %v445
    %1124 = vmatpush.bf16.msra.mxu0 %v441
    %1125 = vmatmul.bf16.gmra.mxu0 %v1103
    %v1126 = vpop.f32.mrf.mxu0
    %v1127 = vadd.f32 0.0, %v1126
    %v1128 = vpop.f32.mrf.mxu0
    %1129 = vdwg.mxu0
    %1130 = vmatpush.bf16.msra.mxu0 %v470
    %1131 = vmatpush.bf16.msra.mxu0 %v466
    %1132 = vmatpush.bf16.msra.mxu0 %v462
    %1133 = vmatpush.bf16.msra.mxu0 %v458
    %1134 = vmatpush.bf16.msra.mxu0 %v454
    %1135 = vmatpush.bf16.msra.mxu0 %v450
    %1136 = vmatpush.bf16.msra.mxu0 %v446
    %1137 = vmatpush.bf16.msra.mxu0 %v442
    %1138 = vmatmul.bf16.gmra.mxu0 %v1103
    %v1139 = vpop.f32.mrf.mxu0
    %v1140 = vadd.f32 0.0, %v1139
    %v1141 = vpop.f32.mrf.mxu0
    %1142 = vdwg.mxu0
    %1143 = vmatpush.bf16.msra.mxu0 %v471
    %1144 = vmatpush.bf16.msra.mxu0 %v467
    %1145 = vmatpush.bf16.msra.mxu0 %v463
    %1146 = vmatpush.bf16.msra.mxu0 %v459
    %1147 = vmatpush.bf16.msra.mxu0 %v455
    %1148 = vmatpush.bf16.msra.mxu0 %v451
    %1149 = vmatpush.bf16.msra.mxu0 %v447
    %1150 = vmatpush.bf16.msra.mxu0 %v443
    %1151 = vmatmul.bf16.gmra.mxu0 %v1103
    %v1152 = vpop.f32.mrf.mxu0
    %v1153 = vadd.f32 0.0, %v1152
    %v1154 = vpop.f32.mrf.mxu0
    %1155 = vdwg.mxu0
    %v1156 = vadd.f32 %v218, %v1114
    %v1157 = vadd.f32 %v247, %v1127
    %v1158 = vadd.f32 %v276, %v1140
    %v1159 = vadd.f32 %v305, %v1153
    %v1160 = vxor.u32 %v1156, 2147483648
    %v1161 = vxor.u32 %v1157, 2147483648
    %v1162 = vxor.u32 %v1158, 2147483648
    %v1163 = vmul.f32 %v1160, 1.442695
    %v1164 = vpow.pop %v1163
    %v1165 = vmul.f32 %v1161, 1.442695
    %v1166 = vpow.pop %v1165
    %v1167 = vmul.f32 %v1162, 1.442695
    %v1168 = vpow.pop %v1167
    %v1169 = vadd.f32 %v1164, 1.0
    %v1170 = vadd.f32 %v1166, 1.0
    %v1171 = vadd.f32 %v1168, 1.0
    %v1172 = vrcp.pop %v1169
    %v1173 = vmul.f32 %v1169, %v1172
    %v1174 = vsub.f32 1.0, %v1173
    %v1175 = vmul.f32 %v1172, %v1174
    %v1176 = vadd.f32 %v1172, %v1175
    %vm1177 = vweird.f32 %v1169
    %vm1178 = vweird.f32 %v1172
    %vm1179 = vmor %vm1177, %vm1178
    %v1180 = vsel %vm1179, %v1172, %v1176
    %v1181 = vand.u32 2147483647, %v1169
    %vm1182 = vcmp.eq.f32.partialorder %v1181, 8.507059e+37
    %v1183 = vand.u32 %v1169, 2147483648
    %v1184 = vor.u32 1.1754944e-38, %v1183
    %v1185 = vsel %vm1182, %v1184, %v1180
    %v1186 = vmul.f32 1.0, %v1185
    %v1187 = vrcp.pop %v1170
    %v1188 = vmul.f32 %v1170, %v1187
    %v1189 = vsub.f32 1.0, %v1188
    %v1190 = vmul.f32 %v1187, %v1189
    %v1191 = vadd.f32 %v1187, %v1190
    %vm1192 = vweird.f32 %v1170
    %vm1193 = vweird.f32 %v1187
    %vm1194 = vmor %vm1192, %vm1193
    %v1195 = vsel %vm1194, %v1187, %v1191
    %v1196 = vand.u32 2147483647, %v1170
    %vm1197 = vcmp.eq.f32.partialorder %v1196, 8.507059e+37
    %v1198 = vand.u32 %v1170, 2147483648
    %v1199 = vor.u32 1.1754944e-38, %v1198
    %v1200 = vsel %vm1197, %v1199, %v1195
    %v1201 = vmul.f32 1.0, %v1200
    %v1202 = vrcp.pop %v1171
    %v1203 = vmul.f32 %v1171, %v1202
    %v1204 = vsub.f32 1.0, %v1203
    %v1205 = vmul.f32 %v1202, %v1204
    %v1206 = vadd.f32 %v1202, %v1205
    %vm1207 = vweird.f32 %v1171
    %vm1208 = vweird.f32 %v1202
    %vm1209 = vmor %vm1207, %vm1208
    %v1210 = vsel %vm1209, %v1202, %v1206
    %v1211 = vand.u32 2147483647, %v1171
    %vm1212 = vcmp.eq.f32.partialorder %v1211, 8.507059e+37
    %v1213 = vand.u32 %v1171, 2147483648
    %v1214 = vor.u32 1.1754944e-38, %v1213
    %v1215 = vsel %vm1212, %v1214, %v1210
    %v1216 = vmul.f32 1.0, %v1215
    %v1217 = vtanh.pop %v1159
    %v1218 = vmul.f32 %v1201, %v1100
    %v1219 = vmul.f32 %v1186, %v1217
    %v1220 = vadd.f32 %v1218, %v1219
    %v1221 = vtanh.pop %v1220
    %v1222 = vmul.f32 %v1216, %v1221
    %v1223 = vpack.c.bf16 %v1222, %v1222
    %1224 = vmatpush.bf16.msra.mxu0 %v468
    %1225 = vmatpush.bf16.msra.mxu0 %v464
    %1226 = vmatpush.bf16.msra.mxu0 %v460
    %1227 = vmatpush.bf16.msra.mxu0 %v456
    %1228 = vmatpush.bf16.msra.mxu0 %v452
    %1229 = vmatpush.bf16.msra.mxu0 %v448
    %1230 = vmatpush.bf16.msra.mxu0 %v444
    %1231 = vmatpush.bf16.msra.mxu0 %v440
    %1232 = vmatmul.bf16.gmra.mxu0 %v1223
    %v1233 = vpop.f32.mrf.mxu0
    %v1234 = vadd.f32 0.0, %v1233
    %v1235 = vpop.f32.mrf.mxu0
    %1236 = vdwg.mxu0
    %1237 = vmatpush.bf16.msra.mxu0 %v469
    %1238 = vmatpush.bf16.msra.mxu0 %v465
    %1239 = vmatpush.bf16.msra.mxu0 %v461
    %1240 = vmatpush.bf16.msra.mxu0 %v457
    %1241 = vmatpush.bf16.msra.mxu0 %v453
    %1242 = vmatpush.bf16.msra.mxu0 %v449
    %1243 = vmatpush.bf16.msra.mxu0 %v445
    %1244 = vmatpush.bf16.msra.mxu0 %v441
    %1245 = vmatmul.bf16.gmra.mxu0 %v1223
    %v1246 = vpop.f32.mrf.mxu0
    %v1247 = vadd.f32 0.0, %v1246
    %v1248 = vpop.f32.mrf.mxu0
    %1249 = vdwg.mxu0
    %1250 = vmatpush.bf16.msra.mxu0 %v470
    %1251 = vmatpush.bf16.msra.mxu0 %v466
    %1252 = vmatpush.bf16.msra.mxu0 %v462
    %1253 = vmatpush.bf16.msra.mxu0 %v458
    %1254 = vmatpush.bf16.msra.mxu0 %v454
    %1255 = vmatpush.bf16.msra.mxu0 %v450
    %1256 = vmatpush.bf16.msra.mxu0 %v446
    %1257 = vmatpush.bf16.msra.mxu0 %v442
    %1258 = vmatmul.bf16.gmra.mxu0 %v1223
    %v1259 = vpop.f32.mrf.mxu0
    %v1260 = vadd.f32 0.0, %v1259
    %v1261 = vpop.f32.mrf.mxu0
    %1262 = vdwg.mxu0
    %1263 = vmatpush.bf16.msra.mxu0 %v471
    %1264 = vmatpush.bf16.msra.mxu0 %v467
    %1265 = vmatpush.bf16.msra.mxu0 %v463
    %1266 = vmatpush.bf16.msra.mxu0 %v459
    %1267 = vmatpush.bf16.msra.mxu0 %v455
    %1268 = vmatpush.bf16.msra.mxu0 %v451
    %1269 = vmatpush.bf16.msra.mxu0 %v447
    %1270 = vmatpush.bf16.msra.mxu0 %v443
    %1271 = vmatmul.bf16.gmra.mxu0 %v1223
    %v1272 = vpop.f32.mrf.mxu0
    %v1273 = vadd.f32 0.0, %v1272
    %v1274 = vpop.f32.mrf.mxu0
    %1275 = vdwg.mxu0
    %v1276 = vadd.f32 %v221, %v1234
    %v1277 = vadd.f32 %v250, %v1247
    %v1278 = vadd.f32 %v279, %v1260
    %v1279 = vadd.f32 %v308, %v1273
    %v1280 = vxor.u32 %v1276, 2147483648
    %v1281 = vxor.u32 %v1277, 2147483648
    %v1282 = vxor.u32 %v1278, 2147483648
    %v1283 = vmul.f32 %v1280, 1.442695
    %v1284 = vpow.pop %v1283
    %v1285 = vmul.f32 %v1281, 1.442695
    %v1286 = vpow.pop %v1285
    %v1287 = vmul.f32 %v1282, 1.442695
    %v1288 = vpow.pop %v1287
    %v1289 = vadd.f32 %v1284, 1.0
    %v1290 = vadd.f32 %v1286, 1.0
    %v1291 = vadd.f32 %v1288, 1.0
    %v1292 = vrcp.pop %v1289
    %v1293 = vmul.f32 %v1289, %v1292
    %v1294 = vsub.f32 1.0, %v1293
    %v1295 = vmul.f32 %v1292, %v1294
    %v1296 = vadd.f32 %v1292, %v1295
    %vm1297 = vweird.f32 %v1289
    %vm1298 = vweird.f32 %v1292
    %vm1299 = vmor %vm1297, %vm1298
    %v1300 = vsel %vm1299, %v1292, %v1296
    %v1301 = vand.u32 2147483647, %v1289
    %vm1302 = vcmp.eq.f32.partialorder %v1301, 8.507059e+37
    %v1303 = vand.u32 %v1289, 2147483648
    %v1304 = vor.u32 1.1754944e-38, %v1303
    %v1305 = vsel %vm1302, %v1304, %v1300
    %v1306 = vmul.f32 1.0, %v1305
    %v1307 = vrcp.pop %v1290
    %v1308 = vmul.f32 %v1290, %v1307
    %v1309 = vsub.f32 1.0, %v1308
    %v1310 = vmul.f32 %v1307, %v1309
    %v1311 = vadd.f32 %v1307, %v1310
    %vm1312 = vweird.f32 %v1290
    %vm1313 = vweird.f32 %v1307
    %vm1314 = vmor %vm1312, %vm1313
    %v1315 = vsel %vm1314, %v1307, %v1311
    %v1316 = vand.u32 2147483647, %v1290
    %vm1317 = vcmp.eq.f32.partialorder %v1316, 8.507059e+37
    %v1318 = vand.u32 %v1290, 2147483648
    %v1319 = vor.u32 1.1754944e-38, %v1318
    %v1320 = vsel %vm1317, %v1319, %v1315
    %v1321 = vmul.f32 1.0, %v1320
    %v1322 = vrcp.pop %v1291
    %v1323 = vmul.f32 %v1291, %v1322
    %v1324 = vsub.f32 1.0, %v1323
    %v1325 = vmul.f32 %v1322, %v1324
    %v1326 = vadd.f32 %v1322, %v1325
    %vm1327 = vweird.f32 %v1291
    %vm1328 = vweird.f32 %v1322
    %vm1329 = vmor %vm1327, %vm1328
    %v1330 = vsel %vm1329, %v1322, %v1326
    %v1331 = vand.u32 2147483647, %v1291
    %vm1332 = vcmp.eq.f32.partialorder %v1331, 8.507059e+37
    %v1333 = vand.u32 %v1291, 2147483648
    %v1334 = vor.u32 1.1754944e-38, %v1333
    %v1335 = vsel %vm1332, %v1334, %v1330
    %v1336 = vmul.f32 1.0, %v1335
    %v1337 = vtanh.pop %v1279
    %v1338 = vmul.f32 %v1321, %v1220
    %v1339 = vmul.f32 %v1306, %v1337
    %v1340 = vadd.f32 %v1338, %v1339
    %v1341 = vtanh.pop %v1340
    %v1342 = vmul.f32 %v1336, %v1341
    %v1343 = vpack.c.bf16 %v1342, %v1342
    %1344 = vmatpush.bf16.msra.mxu0 %v468
    %1345 = vmatpush.bf16.msra.mxu0 %v464
    %1346 = vmatpush.bf16.msra.mxu0 %v460
    %1347 = vmatpush.bf16.msra.mxu0 %v456
    %1348 = vmatpush.bf16.msra.mxu0 %v452
    %1349 = vmatpush.bf16.msra.mxu0 %v448
    %1350 = vmatpush.bf16.msra.mxu0 %v444
    %1351 = vmatpush.bf16.msra.mxu0 %v440
    %1352 = vmatmul.bf16.gmra.mxu0 %v1343
    %v1353 = vpop.f32.mrf.mxu0
    %v1354 = vadd.f32 0.0, %v1353
    %v1355 = vpop.f32.mrf.mxu0
    %1356 = vdwg.mxu0
    %1357 = vmatpush.bf16.msra.mxu0 %v469
    %1358 = vmatpush.bf16.msra.mxu0 %v465
    %1359 = vmatpush.bf16.msra.mxu0 %v461
    %1360 = vmatpush.bf16.msra.mxu0 %v457
    %1361 = vmatpush.bf16.msra.mxu0 %v453
    %1362 = vmatpush.bf16.msra.mxu0 %v449
    %1363 = vmatpush.bf16.msra.mxu0 %v445
    %1364 = vmatpush.bf16.msra.mxu0 %v441
    %1365 = vmatmul.bf16.gmra.mxu0 %v1343
    %v1366 = vpop.f32.mrf.mxu0
    %v1367 = vadd.f32 0.0, %v1366
    %v1368 = vpop.f32.mrf.mxu0
    %1369 = vdwg.mxu0
    %1370 = vmatpush.bf16.msra.mxu0 %v470
    %1371 = vmatpush.bf16.msra.mxu0 %v466
    %1372 = vmatpush.bf16.msra.mxu0 %v462
    %1373 = vmatpush.bf16.msra.mxu0 %v458
    %1374 = vmatpush.bf16.msra.mxu0 %v454
    %1375 = vmatpush.bf16.msra.mxu0 %v450
    %1376 = vmatpush.bf16.msra.mxu0 %v446
    %1377 = vmatpush.bf16.msra.mxu0 %v442
    %1378 = vmatmul.bf16.gmra.mxu0 %v1343
    %v1379 = vpop.f32.mrf.mxu0
    %v1380 = vadd.f32 0.0, %v1379
    %v1381 = vpop.f32.mrf.mxu0
    %1382 = vdwg.mxu0
    %1383 = vmatpush.bf16.msra.mxu0 %v471
    %1384 = vmatpush.bf16.msra.mxu0 %v467
    %1385 = vmatpush.bf16.msra.mxu0 %v463
    %1386 = vmatpush.bf16.msra.mxu0 %v459
    %1387 = vmatpush.bf16.msra.mxu0 %v455
    %1388 = vmatpush.bf16.msra.mxu0 %v451
    %1389 = vmatpush.bf16.msra.mxu0 %v447
    %1390 = vmatpush.bf16.msra.mxu0 %v443
    %1391 = vmatmul.bf16.gmra.mxu0 %v1343
    %v1392 = vpop.f32.mrf.mxu0
    %v1393 = vadd.f32 0.0, %v1392
    %v1394 = vpop.f32.mrf.mxu0
    %1395 = vdwg.mxu0
    %v1396 = vadd.f32 %v223, %v1354
    %v1397 = vadd.f32 %v252, %v1367
    %v1398 = vadd.f32 %v281, %v1380
    %v1399 = vadd.f32 %v310, %v1393
    %v1400 = vxor.u32 %v1396, 2147483648
    %v1401 = vxor.u32 %v1397, 2147483648
    %v1402 = vxor.u32 %v1398, 2147483648
    %v1403 = vmul.f32 %v1400, 1.442695
    %v1404 = vpow.pop %v1403
    %v1405 = vmul.f32 %v1401, 1.442695
    %v1406 = vpow.pop %v1405
    %v1407 = vmul.f32 %v1402, 1.442695
    %v1408 = vpow.pop %v1407
    %v1409 = vadd.f32 %v1404, 1.0
    %v1410 = vadd.f32 %v1406, 1.0
    %v1411 = vadd.f32 %v1408, 1.0
    %v1412 = vrcp.pop %v1409
    %v1413 = vmul.f32 %v1409, %v1412
    %v1414 = vsub.f32 1.0, %v1413
    %v1415 = vmul.f32 %v1412, %v1414
    %v1416 = vadd.f32 %v1412, %v1415
    %vm1417 = vweird.f32 %v1409
    %vm1418 = vweird.f32 %v1412
    %vm1419 = vmor %vm1417, %vm1418
    %v1420 = vsel %vm1419, %v1412, %v1416
    %v1421 = vand.u32 2147483647, %v1409
    %vm1422 = vcmp.eq.f32.partialorder %v1421, 8.507059e+37
    %v1423 = vand.u32 %v1409, 2147483648
    %v1424 = vor.u32 1.1754944e-38, %v1423
    %v1425 = vsel %vm1422, %v1424, %v1420
    %v1426 = vmul.f32 1.0, %v1425
    %v1427 = vrcp.pop %v1410
    %v1428 = vmul.f32 %v1410, %v1427
    %v1429 = vsub.f32 1.0, %v1428
    %v1430 = vmul.f32 %v1427, %v1429
    %v1431 = vadd.f32 %v1427, %v1430
    %vm1432 = vweird.f32 %v1410
    %vm1433 = vweird.f32 %v1427
    %vm1434 = vmor %vm1432, %vm1433
    %v1435 = vsel %vm1434, %v1427, %v1431
    %v1436 = vand.u32 2147483647, %v1410
    %vm1437 = vcmp.eq.f32.partialorder %v1436, 8.507059e+37
    %v1438 = vand.u32 %v1410, 2147483648
    %v1439 = vor.u32 1.1754944e-38, %v1438
    %v1440 = vsel %vm1437, %v1439, %v1435
    %v1441 = vmul.f32 1.0, %v1440
    %v1442 = vrcp.pop %v1411
    %v1443 = vmul.f32 %v1411, %v1442
    %v1444 = vsub.f32 1.0, %v1443
    %v1445 = vmul.f32 %v1442, %v1444
    %v1446 = vadd.f32 %v1442, %v1445
    %vm1447 = vweird.f32 %v1411
    %vm1448 = vweird.f32 %v1442
    %vm1449 = vmor %vm1447, %vm1448
    %v1450 = vsel %vm1449, %v1442, %v1446
    %v1451 = vand.u32 2147483647, %v1411
    %vm1452 = vcmp.eq.f32.partialorder %v1451, 8.507059e+37
    %v1453 = vand.u32 %v1411, 2147483648
    %v1454 = vor.u32 1.1754944e-38, %v1453
    %v1455 = vsel %vm1452, %v1454, %v1450
    %v1456 = vmul.f32 1.0, %v1455
    %v1457 = vtanh.pop %v1399
    %v1458 = vmul.f32 %v1441, %v1340
    %v1459 = vmul.f32 %v1426, %v1457
    %v1460 = vadd.f32 %v1458, %v1459
    %v1461 = vtanh.pop %v1460
    %v1462 = vmul.f32 %v1456, %v1461
    %v1463 = vld [vmem:[%s1] sm:$0xff]
    %vm1464 = vcmp.gt.s32.totalorder %v1463, 0
    %vm1465 = vcmp.gt.s32.totalorder %v1463, 1
    %vm1466 = vcmp.gt.s32.totalorder %v1463, 2
    %vm1467 = vcmp.gt.s32.totalorder %v1463, 3
    %vm1468 = vcmp.gt.s32.totalorder %v1463, 4
    %vm1469 = vcmp.gt.s32.totalorder %v1463, 5
    %vm1470 = vcmp.gt.s32.totalorder %v1463, 6
    %vm1471 = vcmp.gt.s32.totalorder %v1463, 7
    %v1472 = vsel %vm1464, 1, 0
    %v1473 = vsel %vm1465, 1, 0
    %v1474 = vsel %vm1466, 1, 0
    %v1475 = vsel %vm1467, 1, 0
    %v1476 = vsel %vm1468, 1, 0
    %v1477 = vsel %vm1469, 1, 0
    %v1478 = vsel %vm1470, 1, 0
    %v1479 = vsel %vm1471, 1, 0
    %v1480 = vcvt.s32.f32 %v1472
    %v1481 = vcvt.s32.f32 %v1473
    %v1482 = vcvt.s32.f32 %v1474
    %v1483 = vcvt.s32.f32 %v1475
    %v1484 = vcvt.s32.f32 %v1476
    %v1485 = vcvt.s32.f32 %v1477
    %v1486 = vcvt.s32.f32 %v1478
    %v1487 = vcvt.s32.f32 %v1479
    %v1488 = vmul.f32 %v622, %v1480
    %v1489 = vmul.f32 %v742, %v1481
    %v1490 = vmul.f32 %v862, %v1482
    %v1491 = vmul.f32 %v982, %v1483
    %v1492 = vmul.f32 %v1102, %v1484
    %v1493 = vmul.f32 %v1222, %v1485
    %v1494 = vmul.f32 %v1342, %v1486
    %v1495 = vmul.f32 %v1462, %v1487
    %v1496 = vpack.c.bf16 %v1489, %v1488
    %v1497 = vpack.c.bf16 %v1491, %v1490
    %v1498 = vpack.c.bf16 %v1493, %v1492
    %v1499 = vpack.c.bf16 %v1495, %v1494
    %v1500 = vld [vmem:[#allocation4] sm:$0xf]
    %v1501 = vld [vmem:[#allocation4 + $0x20] sm:$0xf]
    %v1502 = vld [vmem:[#allocation4 + $0x40] sm:$0xf]
    %v1503 = vld [vmem:[#allocation4 + $0x60] sm:$0xf]
    %v1504 = vld [vmem:[#allocation4 + $0x80] sm:$0xf]
    %v1505 = vld [vmem:[#allocation4 + $0xa0] sm:$0xf]
    %v1506 = vld [vmem:[#allocation4 + $0xc0] sm:$0xf]
    %v1507 = vld [vmem:[#allocation4 + $0xe0] sm:$0xf]
    %v1508 = vld [vmem:[#allocation4 + $0x100] sm:$0xf]
    %v1509 = vld [vmem:[#allocation4 + $0x120] sm:$0xf]
    %v1510 = vld [vmem:[#allocation4 + $0x140] sm:$0xf]
    %v1511 = vld [vmem:[#allocation4 + $0x160] sm:$0xf]
    %v1512 = vld [vmem:[#allocation4 + $0x180] sm:$0xf]
    %v1513 = vld [vmem:[#allocation4 + $0x1a0] sm:$0xf]
    %v1514 = vld [vmem:[#allocation4 + $0x1c0] sm:$0xf]
    %v1515 = vld [vmem:[#allocation4 + $0x1e0] sm:$0xf]
    %v1516 = vld [vmem:[%s5] sm:$0x1]
    %v1518 = vperm.slane %v1516, 0
    %v1536 = vunpack.c.l.b16 %v1500
    %v1537 = vunpack.c.l.b16 %v1501
    %v1538 = vunpack.c.l.b16 %v1502
    %v1539 = vunpack.c.l.b16 %v1503
    %v1540 = vunpack.c.l.b16 %v1504
    %v1541 = vunpack.c.l.b16 %v1505
    %v1542 = vunpack.c.l.b16 %v1506
    %v1543 = vunpack.c.l.b16 %v1507
    %v1544 = vunpack.c.l.b16 %v1508
    %v1545 = vunpack.c.l.b16 %v1509
    %v1546 = vunpack.c.l.b16 %v1510
    %v1547 = vunpack.c.l.b16 %v1511
    %v1548 = vunpack.c.l.b16 %v1512
    %v1549 = vunpack.c.l.b16 %v1513
    %v1550 = vunpack.c.l.b16 %v1514
    %v1551 = vunpack.c.l.b16 %v1515
    %v1552 = vpack.c.b16 %v1537, %v1536
    %v1553 = vpack.c.b16 %v1539, %v1538
    %v1554 = vpack.c.b16 %v1541, %v1540
    %v1555 = vpack.c.b16 %v1543, %v1542
    %v1556 = vpack.c.b16 %v1545, %v1544
    %v1557 = vpack.c.b16 %v1547, %v1546
    %v1558 = vpack.c.b16 %v1549, %v1548
    %v1559 = vpack.c.b16 %v1551, %v1550
    %1568 = vmatpush.bf16.msra.mxu0 %v1559
    %1569 = vmatpush.bf16.msra.mxu0 %v1558
    %1570 = vmatpush.bf16.msra.mxu0 %v1557
    %1571 = vmatpush.bf16.msra.mxu0 %v1556
    %1572 = vmatpush.bf16.msra.mxu0 %v1555
    %1573 = vmatpush.bf16.msra.mxu0 %v1554
    %1574 = vmatpush.bf16.msra.mxu0 %v1553
    %1575 = vmatpush.bf16.msra.mxu0 %v1552
    %1576 = vmatmul.bf16.gmra.mxu0 %v1496
    %v1577 = vpop.f32.mrf.mxu0
    %v1578 = vadd.f32 %v1518, %v1577
    %v1579 = vpop.f32.mrf.mxu0
    %v1580 = vadd.f32 %v1518, %v1579
    %1581 = vmatmul.bf16.gmra.mxu0 %v1497
    %v1582 = vpop.f32.mrf.mxu0
    %v1583 = vadd.f32 %v1518, %v1582
    %v1584 = vpop.f32.mrf.mxu0
    %v1585 = vadd.f32 %v1518, %v1584
    %1586 = vmatmul.bf16.gmra.mxu0 %v1498
    %v1587 = vpop.f32.mrf.mxu0
    %v1588 = vadd.f32 %v1518, %v1587
    %v1589 = vpop.f32.mrf.mxu0
    %v1590 = vadd.f32 %v1518, %v1589
    %1591 = vmatmul.bf16.gmra.mxu0 %v1499
    %v1592 = vpop.f32.mrf.mxu0
    %v1593 = vadd.f32 %v1518, %v1592
    %v1594 = vpop.f32.mrf.mxu0
    %v1595 = vadd.f32 %v1518, %v1594
    %1596 = vdwg.mxu0
    %v1597 = vmax.f32 %v1578, 0.0
    %v1598 = vmax.f32 %v1580, 0.0
    %v1599 = vmax.f32 %v1583, 0.0
    %v1600 = vmax.f32 %v1585, 0.0
    %v1601 = vmax.f32 %v1588, 0.0
    %v1602 = vmax.f32 %v1590, 0.0
    %v1603 = vmax.f32 %v1593, 0.0
    %v1604 = vmax.f32 %v1595, 0.0
    %v1605 = vpack.c.bf16 %v1598, %v1597
    %v1606 = vpack.c.bf16 %v1600, %v1599
    %v1607 = vpack.c.bf16 %v1602, %v1601
    %v1608 = vpack.c.bf16 %v1604, %v1603
    %v1609 = vld [vmem:[#allocation4 + $0x4] sm:$0xf]
    %v1610 = vld [vmem:[#allocation4 + $0x24] sm:$0xf]
    %v1611 = vld [vmem:[#allocation4 + $0x44] sm:$0xf]
    %v1612 = vld [vmem:[#allocation4 + $0x64] sm:$0xf]
    %v1613 = vld [vmem:[#allocation4 + $0x84] sm:$0xf]
    %v1614 = vld [vmem:[#allocation4 + $0xa4] sm:$0xf]
    %v1615 = vld [vmem:[#allocation4 + $0xc4] sm:$0xf]
    %v1616 = vld [vmem:[#allocation4 + $0xe4] sm:$0xf]
    %v1617 = vld [vmem:[#allocation4 + $0x104] sm:$0xf]
    %v1618 = vld [vmem:[#allocation4 + $0x124] sm:$0xf]
    %v1619 = vld [vmem:[#allocation4 + $0x144] sm:$0xf]
    %v1620 = vld [vmem:[#allocation4 + $0x164] sm:$0xf]
    %v1621 = vld [vmem:[#allocation4 + $0x184] sm:$0xf]
    %v1622 = vld [vmem:[#allocation4 + $0x1a4] sm:$0xf]
    %v1623 = vld [vmem:[#allocation4 + $0x1c4] sm:$0xf]
    %v1624 = vld [vmem:[#allocation4 + $0x1e4] sm:$0xf]
    %v1625 = vld [vmem:[%s5 + $0x1] sm:$0x1]
    %v1627 = vperm.slane %v1625, 0
    %v1645 = vunpack.c.l.b16 %v1609
    %v1646 = vunpack.c.l.b16 %v1610
    %v1647 = vunpack.c.l.b16 %v1611
    %v1648 = vunpack.c.l.b16 %v1612
    %v1649 = vunpack.c.l.b16 %v1613
    %v1650 = vunpack.c.l.b16 %v1614
    %v1651 = vunpack.c.l.b16 %v1615
    %v1652 = vunpack.c.l.b16 %v1616
    %v1653 = vunpack.c.l.b16 %v1617
    %v1654 = vunpack.c.l.b16 %v1618
    %v1655 = vunpack.c.l.b16 %v1619
    %v1656 = vunpack.c.l.b16 %v1620
    %v1657 = vunpack.c.l.b16 %v1621
    %v1658 = vunpack.c.l.b16 %v1622
    %v1659 = vunpack.c.l.b16 %v1623
    %v1660 = vunpack.c.l.b16 %v1624
    %v1661 = vpack.c.b16 %v1646, %v1645
    %v1662 = vpack.c.b16 %v1648, %v1647
    %v1663 = vpack.c.b16 %v1650, %v1649
    %v1664 = vpack.c.b16 %v1652, %v1651
    %v1665 = vpack.c.b16 %v1654, %v1653
    %v1666 = vpack.c.b16 %v1656, %v1655
    %v1667 = vpack.c.b16 %v1658, %v1657
    %v1668 = vpack.c.b16 %v1660, %v1659
    %1677 = vmatpush.bf16.msra.mxu0 %v1668
    %1678 = vmatpush.bf16.msra.mxu0 %v1667
    %1679 = vmatpush.bf16.msra.mxu0 %v1666
    %1680 = vmatpush.bf16.msra.mxu0 %v1665
    %1681 = vmatpush.bf16.msra.mxu0 %v1664
    %1682 = vmatpush.bf16.msra.mxu0 %v1663
    %1683 = vmatpush.bf16.msra.mxu0 %v1662
    %1684 = vmatpush.bf16.msra.mxu0 %v1661
    %1685 = vmatmul.bf16.gmra.mxu0 %v1605
    %v1686 = vpop.f32.mrf.mxu0
    %v1687 = vadd.f32 %v1627, %v1686
    %v1688 = vpop.f32.mrf.mxu0
    %v1689 = vadd.f32 %v1627, %v1688
    %1690 = vmatmul.bf16.gmra.mxu0 %v1606
    %v1691 = vpop.f32.mrf.mxu0
    %v1692 = vadd.f32 %v1627, %v1691
    %v1693 = vpop.f32.mrf.mxu0
    %v1694 = vadd.f32 %v1627, %v1693
    %1695 = vmatmul.bf16.gmra.mxu0 %v1607
    %v1696 = vpop.f32.mrf.mxu0
    %v1697 = vadd.f32 %v1627, %v1696
    %v1698 = vpop.f32.mrf.mxu0
    %v1699 = vadd.f32 %v1627, %v1698
    %1700 = vmatmul.bf16.gmra.mxu0 %v1608
    %v1701 = vpop.f32.mrf.mxu0
    %v1702 = vadd.f32 %v1627, %v1701
    %v1703 = vpop.f32.mrf.mxu0
    %v1704 = vadd.f32 %v1627, %v1703
    %1705 = vdwg.mxu0
    %v1706 = vmax.f32 %v1687, 0.0
    %v1707 = vmax.f32 %v1689, 0.0
    %v1708 = vmax.f32 %v1692, 0.0
    %v1709 = vmax.f32 %v1694, 0.0
    %v1710 = vmax.f32 %v1697, 0.0
    %v1711 = vmax.f32 %v1699, 0.0
    %v1712 = vmax.f32 %v1702, 0.0
    %v1713 = vmax.f32 %v1704, 0.0
    %v1714 = vpack.c.bf16 %v1707, %v1706
    %v1715 = vpack.c.bf16 %v1709, %v1708
    %v1716 = vpack.c.bf16 %v1711, %v1710
    %v1717 = vpack.c.bf16 %v1713, %v1712
    %v1718 = vld [vmem:[#allocation4 + $0x8] sm:$0xf]
    %v1719 = vld [vmem:[#allocation4 + $0x28] sm:$0xf]
    %v1720 = vld [vmem:[#allocation4 + $0x48] sm:$0xf]
    %v1721 = vld [vmem:[#allocation4 + $0x68] sm:$0xf]
    %v1722 = vld [vmem:[#allocation4 + $0x88] sm:$0xf]
    %v1723 = vld [vmem:[#allocation4 + $0xa8] sm:$0xf]
    %v1724 = vld [vmem:[#allocation4 + $0xc8] sm:$0xf]
    %v1725 = vld [vmem:[#allocation4 + $0xe8] sm:$0xf]
    %v1726 = vld [vmem:[#allocation4 + $0x108] sm:$0xf]
    %v1727 = vld [vmem:[#allocation4 + $0x128] sm:$0xf]
    %v1728 = vld [vmem:[#allocation4 + $0x148] sm:$0xf]
    %v1729 = vld [vmem:[#allocation4 + $0x168] sm:$0xf]
    %v1730 = vld [vmem:[#allocation4 + $0x188] sm:$0xf]
    %v1731 = vld [vmem:[#allocation4 + $0x1a8] sm:$0xf]
    %v1732 = vld [vmem:[#allocation4 + $0x1c8] sm:$0xf]
    %v1733 = vld [vmem:[#allocation4 + $0x1e8] sm:$0xf]
    %v1734 = vld [vmem:[%s5 + $0x2] sm:$0x1]
    %v1736 = vperm.slane %v1734, 0
    %v1754 = vunpack.c.l.b16 %v1718
    %v1755 = vunpack.c.l.b16 %v1719
    %v1756 = vunpack.c.l.b16 %v1720
    %v1757 = vunpack.c.l.b16 %v1721
    %v1758 = vunpack.c.l.b16 %v1722
    %v1759 = vunpack.c.l.b16 %v1723
    %v1760 = vunpack.c.l.b16 %v1724
    %v1761 = vunpack.c.l.b16 %v1725
    %v1762 = vunpack.c.l.b16 %v1726
    %v1763 = vunpack.c.l.b16 %v1727
    %v1764 = vunpack.c.l.b16 %v1728
    %v1765 = vunpack.c.l.b16 %v1729
    %v1766 = vunpack.c.l.b16 %v1730
    %v1767 = vunpack.c.l.b16 %v1731
    %v1768 = vunpack.c.l.b16 %v1732
    %v1769 = vunpack.c.l.b16 %v1733
    %v1770 = vpack.c.b16 %v1755, %v1754
    %v1771 = vpack.c.b16 %v1757, %v1756
    %v1772 = vpack.c.b16 %v1759, %v1758
    %v1773 = vpack.c.b16 %v1761, %v1760
    %v1774 = vpack.c.b16 %v1763, %v1762
    %v1775 = vpack.c.b16 %v1765, %v1764
    %v1776 = vpack.c.b16 %v1767, %v1766
    %v1777 = vpack.c.b16 %v1769, %v1768
    %1786 = vmatpush.bf16.msra.mxu0 %v1777
    %1787 = vmatpush.bf16.msra.mxu0 %v1776
    %1788 = vmatpush.bf16.msra.mxu0 %v1775
    %1789 = vmatpush.bf16.msra.mxu0 %v1774
    %1790 = vmatpush.bf16.msra.mxu0 %v1773
    %1791 = vmatpush.bf16.msra.mxu0 %v1772
    %1792 = vmatpush.bf16.msra.mxu0 %v1771
    %1793 = vmatpush.bf16.msra.mxu0 %v1770
    %1794 = vmatmul.bf16.gmra.mxu0 %v1714
    %v1795 = vpop.f32.mrf.mxu0
    %v1796 = vadd.f32 %v1736, %v1795
    %v1797 = vpop.f32.mrf.mxu0
    %v1798 = vadd.f32 %v1736, %v1797
    %1799 = vmatmul.bf16.gmra.mxu0 %v1715
    %v1800 = vpop.f32.mrf.mxu0
    %v1801 = vadd.f32 %v1736, %v1800
    %v1802 = vpop.f32.mrf.mxu0
    %v1803 = vadd.f32 %v1736, %v1802
    %1804 = vmatmul.bf16.gmra.mxu0 %v1716
    %v1805 = vpop.f32.mrf.mxu0
    %v1806 = vadd.f32 %v1736, %v1805
    %v1807 = vpop.f32.mrf.mxu0
    %v1808 = vadd.f32 %v1736, %v1807
    %1809 = vmatmul.bf16.gmra.mxu0 %v1717
    %v1810 = vpop.f32.mrf.mxu0
    %v1811 = vadd.f32 %v1736, %v1810
    %v1812 = vpop.f32.mrf.mxu0
    %v1813 = vadd.f32 %v1736, %v1812
    %1814 = vdwg.mxu0
    %v1815 = vmax.f32 %v1796, %v1806
    %v1816 = vmax.f32 %v1798, %v1808
    %v1817 = vmax.f32 %v1801, %v1811
    %v1818 = vmax.f32 %v1803, %v1813
    %v1819 = vmax.f32 %v1815, %v1816
    %v1820 = vmax.f32 %v1817, %v1818
    %v1821 = vmax.f32 %v1819, %v1820
    %v1822 = vsub.f32 %v1796, %v1821
    %v1823 = vsub.f32 %v1798, %v1821
    %v1824 = vsub.f32 %v1801, %v1821
    %v1825 = vsub.f32 %v1803, %v1821
    %v1826 = vsub.f32 %v1806, %v1821
    %v1827 = vsub.f32 %v1808, %v1821
    %v1828 = vsub.f32 %v1811, %v1821
    %v1829 = vsub.f32 %v1813, %v1821
    %v1830 = vmul.f32 %v1822, 1.442695
    %v1831 = vpow.pop %v1830
    %v1832 = vmul.f32 %v1823, 1.442695
    %v1833 = vpow.pop %v1832
    %v1834 = vmul.f32 %v1824, 1.442695
    %v1835 = vpow.pop %v1834
    %v1836 = vmul.f32 %v1825, 1.442695
    %v1837 = vpow.pop %v1836
    %v1838 = vmul.f32 %v1826, 1.442695
    %v1839 = vpow.pop %v1838
    %v1840 = vmul.f32 %v1827, 1.442695
    %v1841 = vpow.pop %v1840
    %v1842 = vmul.f32 %v1828, 1.442695
    %v1843 = vpow.pop %v1842
    %v1844 = vmul.f32 %v1829, 1.442695
    %v1845 = vpow.pop %v1844
    %v1846 = vadd.f32 %v1831, %v1833
    %v1847 = vadd.f32 %v1846, %v1835
    %v1848 = vadd.f32 %v1847, %v1837
    %v1849 = vadd.f32 %v1848, %v1839
    %v1850 = vadd.f32 %v1849, %v1841
    %v1851 = vadd.f32 %v1850, %v1843
    %v1852 = vadd.f32 %v1851, %v1845
    %v1853 = vrcp.pop %v1852
    %v1854 = vmul.f32 %v1831, %v1853
    %v1855 = vmul.f32 %v1833, %v1853
    %v1856 = vmul.f32 %v1835, %v1853
    %v1857 = vmul.f32 %v1837, %v1853
    %v1858 = vmul.f32 %v1839, %v1853
    %v1859 = vmul.f32 %v1841, %v1853
    %v1860 = vmul.f32 %v1843, %v1853
    %v1861 = vmul.f32 %v1845, %v1853
    %v1862 = vmul.f32 %v1854, %v1488
    %v1863 = vmul.f32 %v1855, %v1489
    %v1864 = vmul.f32 %v1856, %v1490
    %v1865 = vmul.f32 %v1857, %v1491
    %v1866 = vmul.f32 %v1858, %v1492
    %v1867 = vmul.f32 %v1859, %v1493
    %v1868 = vmul.f32 %v1860, %v1494
    %v1869 = vmul.f32 %v1861, %v1495
    %v1870 = vadd.f32 %v1862, %v1863
    %v1871 = vadd.f32 %v1870, %v1864
    %v1872 = vadd.f32 %v1871, %v1865
    %v1873 = vadd.f32 %v1872, %v1866
    %v1874 = vadd.f32 %v1873, %v1867
    %v1875 = vadd.f32 %v1874, %v1868
    %v1876 = vadd.f32 %v1875, %v1869
    %v1877 = vpack.c.bf16 %v1876, %v1876
    %v1878 = vld [vmem:[#allocation4 + $0xc] sm:$0xf]
    %v1879 = vld [vmem:[#allocation4 + $0x2c] sm:$0xf]
    %v1880 = vld [vmem:[#allocation4 + $0x4c] sm:$0xf]
    %v1881 = vld [vmem:[#allocation4 + $0x6c] sm:$0xf]
    %v1882 = vld [vmem:[#allocation4 + $0x8c] sm:$0xf]
    %v1883 = vld [vmem:[#allocation4 + $0xac] sm:$0xf]
    %v1884 = vld [vmem:[#allocation4 + $0xcc] sm:$0xf]
    %v1885 = vld [vmem:[#allocation4 + $0xec] sm:$0xf]
    %v1886 = vld [vmem:[#allocation4 + $0x10c] sm:$0xf]
    %v1887 = vld [vmem:[#allocation4 + $0x12c] sm:$0xf]
    %v1888 = vld [vmem:[#allocation4 + $0x14c] sm:$0xf]
    %v1889 = vld [vmem:[#allocation4 + $0x16c] sm:$0xf]
    %v1890 = vld [vmem:[#allocation4 + $0x18c] sm:$0xf]
    %v1891 = vld [vmem:[#allocation4 + $0x1ac] sm:$0xf]
    %v1892 = vld [vmem:[#allocation4 + $0x1cc] sm:$0xf]
    %v1893 = vld [vmem:[#allocation4 + $0x1ec] sm:$0xf]
    %v1894 = vld [vmem:[%s5 + $0x3] sm:$0x1]
    %v1896 = vperm.slane %v1894, 0
    %v1914 = vunpack.c.l.b16 %v1878
    %v1915 = vunpack.c.l.b16 %v1879
    %v1916 = vunpack.c.l.b16 %v1880
    %v1917 = vunpack.c.l.b16 %v1881
    %v1918 = vunpack.c.l.b16 %v1882
    %v1919 = vunpack.c.l.b16 %v1883
    %v1920 = vunpack.c.l.b16 %v1884
    %v1921 = vunpack.c.l.b16 %v1885
    %v1922 = vunpack.c.l.b16 %v1886
    %v1923 = vunpack.c.l.b16 %v1887
    %v1924 = vunpack.c.l.b16 %v1888
    %v1925 = vunpack.c.l.b16 %v1889
    %v1926 = vunpack.c.l.b16 %v1890
    %v1927 = vunpack.c.l.b16 %v1891
    %v1928 = vunpack.c.l.b16 %v1892
    %v1929 = vunpack.c.l.b16 %v1893
    %v1930 = vpack.c.b16 %v1915, %v1914
    %v1931 = vpack.c.b16 %v1917, %v1916
    %v1932 = vpack.c.b16 %v1919, %v1918
    %v1933 = vpack.c.b16 %v1921, %v1920
    %v1934 = vpack.c.b16 %v1923, %v1922
    %v1935 = vpack.c.b16 %v1925, %v1924
    %v1936 = vpack.c.b16 %v1927, %v1926
    %v1937 = vpack.c.b16 %v1929, %v1928
    %1946 = vmatpush.bf16.msra.mxu0 %v1937
    %1947 = vmatpush.bf16.msra.mxu0 %v1936
    %1948 = vmatpush.bf16.msra.mxu0 %v1935
    %1949 = vmatpush.bf16.msra.mxu0 %v1934
    %1950 = vmatpush.bf16.msra.mxu0 %v1933
    %1951 = vmatpush.bf16.msra.mxu0 %v1932
    %1952 = vmatpush.bf16.msra.mxu0 %v1931
    %1953 = vmatpush.bf16.msra.mxu0 %v1930
    %1954 = vmatmul.bf16.gmra.mxu0 %v1877
    %v1955 = vpop.f32.mrf.mxu0
    %v1956 = vadd.f32 %v1896, %v1955
    %v1957 = vpop.f32.mrf.mxu0
    %1958 = vdwg.mxu0
    %v1959 = vmax.f32 %v1956, 0.0
    %v1960 = vpack.c.bf16 %v1959, %v1959
    %v1961 = vld [vmem:[#allocation4 + $0x10] sm:$0xf]
    %v1962 = vld [vmem:[#allocation4 + $0x30] sm:$0xf]
    %v1963 = vld [vmem:[#allocation4 + $0x50] sm:$0xf]
    %v1964 = vld [vmem:[#allocation4 + $0x70] sm:$0xf]
    %v1965 = vld [vmem:[#allocation4 + $0x90] sm:$0xf]
    %v1966 = vld [vmem:[#allocation4 + $0xb0] sm:$0xf]
    %v1967 = vld [vmem:[#allocation4 + $0xd0] sm:$0xf]
    %v1968 = vld [vmem:[#allocation4 + $0xf0] sm:$0xf]
    %v1969 = vld [vmem:[#allocation4 + $0x110] sm:$0xf]
    %v1970 = vld [vmem:[#allocation4 + $0x130] sm:$0xf]
    %v1971 = vld [vmem:[#allocation4 + $0x150] sm:$0xf]
    %v1972 = vld [vmem:[#allocation4 + $0x170] sm:$0xf]
    %v1973 = vld [vmem:[#allocation4 + $0x190] sm:$0xf]
    %v1974 = vld [vmem:[#allocation4 + $0x1b0] sm:$0xf]
    %v1975 = vld [vmem:[#allocation4 + $0x1d0] sm:$0xf]
    %v1976 = vld [vmem:[#allocation4 + $0x1f0] sm:$0xf]
    %v1977 = vld [vmem:[%s5 + $0x4] sm:$0x1]
    %v1979 = vperm.slane %v1977, 0
    %v1997 = vunpack.c.l.b16 %v1961
    %v1998 = vunpack.c.l.b16 %v1962
    %v1999 = vunpack.c.l.b16 %v1963
    %v2000 = vunpack.c.l.b16 %v1964
    %v2001 = vunpack.c.l.b16 %v1965
    %v2002 = vunpack.c.l.b16 %v1966
    %v2003 = vunpack.c.l.b16 %v1967
    %v2004 = vunpack.c.l.b16 %v1968
    %v2005 = vunpack.c.l.b16 %v1969
    %v2006 = vunpack.c.l.b16 %v1970
    %v2007 = vunpack.c.l.b16 %v1971
    %v2008 = vunpack.c.l.b16 %v1972
    %v2009 = vunpack.c.l.b16 %v1973
    %v2010 = vunpack.c.l.b16 %v1974
    %v2011 = vunpack.c.l.b16 %v1975
    %v2012 = vunpack.c.l.b16 %v1976
    %v2013 = vpack.c.b16 %v1998, %v1997
    %v2014 = vpack.c.b16 %v2000, %v1999
    %v2015 = vpack.c.b16 %v2002, %v2001
    %v2016 = vpack.c.b16 %v2004, %v2003
    %v2017 = vpack.c.b16 %v2006, %v2005
    %v2018 = vpack.c.b16 %v2008, %v2007
    %v2019 = vpack.c.b16 %v2010, %v2009
    %v2020 = vpack.c.b16 %v2012, %v2011
    %2029 = vmatpush.bf16.msra.mxu0 %v2020
    %2030 = vmatpush.bf16.msra.mxu0 %v2019
    %2031 = vmatpush.bf16.msra.mxu0 %v2018
    %2032 = vmatpush.bf16.msra.mxu0 %v2017
    %2033 = vmatpush.bf16.msra.mxu0 %v2016
    %2034 = vmatpush.bf16.msra.mxu0 %v2015
    %2035 = vmatpush.bf16.msra.mxu0 %v2014
    %2036 = vmatpush.bf16.msra.mxu0 %v2013
    %2037 = vmatmul.bf16.gmra.mxu0 %v1960
    %v2038 = vpop.f32.mrf.mxu0
    %v2039 = vadd.f32 %v1979, %v2038
    %v2040 = vpop.f32.mrf.mxu0
    %2041 = vdwg.mxu0
    %v2042 = vmax.f32 %v2039, 0.0
    %v2043 = vpack.c.bf16 %v2042, %v2042
    %v2044 = vld [vmem:[#allocation4 + $0x14] sm:$0xff]
    %v2045 = vld [vmem:[#allocation4 + $0x1c] sm:$0xf]
    %v2046 = vld [vmem:[#allocation4 + $0x34] sm:$0xff]
    %v2047 = vld [vmem:[#allocation4 + $0x3c] sm:$0xf]
    %v2048 = vld [vmem:[#allocation4 + $0x54] sm:$0xff]
    %v2049 = vld [vmem:[#allocation4 + $0x5c] sm:$0xf]
    %v2050 = vld [vmem:[#allocation4 + $0x74] sm:$0xff]
    %v2051 = vld [vmem:[#allocation4 + $0x7c] sm:$0xf]
    %v2052 = vld [vmem:[#allocation4 + $0x94] sm:$0xff]
    %v2053 = vld [vmem:[#allocation4 + $0x9c] sm:$0xf]
    %v2054 = vld [vmem:[#allocation4 + $0xb4] sm:$0xff]
    %v2055 = vld [vmem:[#allocation4 + $0xbc] sm:$0xf]
    %v2056 = vld [vmem:[#allocation4 + $0xd4] sm:$0xff]
    %v2057 = vld [vmem:[#allocation4 + $0xdc] sm:$0xf]
    %v2058 = vld [vmem:[#allocation4 + $0xf4] sm:$0xff]
    %v2059 = vld [vmem:[#allocation4 + $0xfc] sm:$0xf]
    %v2060 = vld [vmem:[#allocation4 + $0x114] sm:$0xff]
    %v2061 = vld [vmem:[#allocation4 + $0x11c] sm:$0xf]
    %v2062 = vld [vmem:[#allocation4 + $0x134] sm:$0xff]
    %v2063 = vld [vmem:[#allocation4 + $0x13c] sm:$0xf]
    %v2064 = vld [vmem:[#allocation4 + $0x154] sm:$0xff]
    %v2065 = vld [vmem:[#allocation4 + $0x15c] sm:$0xf]
    %v2066 = vld [vmem:[#allocation4 + $0x174] sm:$0xff]
    %v2067 = vld [vmem:[#allocation4 + $0x17c] sm:$0xf]
    %v2068 = vld [vmem:[#allocation4 + $0x194] sm:$0xff]
    %v2069 = vld [vmem:[#allocation4 + $0x19c] sm:$0xf]
    %v2070 = vld [vmem:[#allocation4 + $0x1b4] sm:$0xff]
    %v2071 = vld [vmem:[#allocation4 + $0x1bc] sm:$0xf]
    %v2072 = vld [vmem:[#allocation4 + $0x1d4] sm:$0xff]
    %v2073 = vld [vmem:[#allocation4 + $0x1dc] sm:$0xf]
    %v2074 = vld [vmem:[#allocation4 + $0x1f4] sm:$0xff]
    %v2075 = vld [vmem:[#allocation4 + $0x1fc] sm:$0xf]
    %v2076 = vld [vmem:[%s5 + $0x5] sm:$0x7]
    %v2078 = vperm.slane %v2076, 0
    %v2079 = vperm.slane %v2076, 1
    %v2080 = vperm.slane %v2076, 2
    %v2116 = vunpack.c.l.b16 %v2044
    %v2117 = vunpack.c.h.b16 %v2044
    %v2118 = vunpack.c.l.b16 %v2045
    %v2119 = vunpack.c.l.b16 %v2046
    %v2120 = vunpack.c.h.b16 %v2046
    %v2121 = vunpack.c.l.b16 %v2047
    %v2122 = vunpack.c.l.b16 %v2048
    %v2123 = vunpack.c.h.b16 %v2048
    %v2124 = vunpack.c.l.b16 %v2049
    %v2125 = vunpack.c.l.b16 %v2050
    %v2126 = vunpack.c.h.b16 %v2050
    %v2127 = vunpack.c.l.b16 %v2051
    %v2128 = vunpack.c.l.b16 %v2052
    %v2129 = vunpack.c.h.b16 %v2052
    %v2130 = vunpack.c.l.b16 %v2053
    %v2131 = vunpack.c.l.b16 %v2054
    %v2132 = vunpack.c.h.b16 %v2054
    %v2133 = vunpack.c.l.b16 %v2055
    %v2134 = vunpack.c.l.b16 %v2056
    %v2135 = vunpack.c.h.b16 %v2056
    %v2136 = vunpack.c.l.b16 %v2057
    %v2137 = vunpack.c.l.b16 %v2058
    %v2138 = vunpack.c.h.b16 %v2058
    %v2139 = vunpack.c.l.b16 %v2059
    %v2140 = vunpack.c.l.b16 %v2060
    %v2141 = vunpack.c.h.b16 %v2060
    %v2142 = vunpack.c.l.b16 %v2061
    %v2143 = vunpack.c.l.b16 %v2062
    %v2144 = vunpack.c.h.b16 %v2062
    %v2145 = vunpack.c.l.b16 %v2063
    %v2146 = vunpack.c.l.b16 %v2064
    %v2147 = vunpack.c.h.b16 %v2064
    %v2148 = vunpack.c.l.b16 %v2065
    %v2149 = vunpack.c.l.b16 %v2066
    %v2150 = vunpack.c.h.b16 %v2066
    %v2151 = vunpack.c.l.b16 %v2067
    %v2152 = vunpack.c.l.b16 %v2068
    %v2153 = vunpack.c.h.b16 %v2068
    %v2154 = vunpack.c.l.b16 %v2069
    %v2155 = vunpack.c.l.b16 %v2070
    %v2156 = vunpack.c.h.b16 %v2070
    %v2157 = vunpack.c.l.b16 %v2071
    %v2158 = vunpack.c.l.b16 %v2072
    %v2159 = vunpack.c.h.b16 %v2072
    %v2160 = vunpack.c.l.b16 %v2073
    %v2161 = vunpack.c.l.b16 %v2074
    %v2162 = vunpack.c.h.b16 %v2074
    %v2163 = vunpack.c.l.b16 %v2075
    %v2164 = vpack.c.b16 %v2119, %v2116
    %v2165 = vpack.c.b16 %v2120, %v2117
    %v2166 = vpack.c.b16 %v2121, %v2118
    %v2167 = vpack.c.b16 %v2125, %v2122
    %v2168 = vpack.c.b16 %v2126, %v2123
    %v2169 = vpack.c.b16 %v2127, %v2124
    %v2170 = vpack.c.b16 %v2131, %v2128
    %v2171 = vpack.c.b16 %v2132, %v2129
    %v2172 = vpack.c.b16 %v2133, %v2130
    %v2173 = vpack.c.b16 %v2137, %v2134
    %v2174 = vpack.c.b16 %v2138, %v2135
    %v2175 = vpack.c.b16 %v2139, %v2136
    %v2176 = vpack.c.b16 %v2143, %v2140
    %v2177 = vpack.c.b16 %v2144, %v2141
    %v2178 = vpack.c.b16 %v2145, %v2142
    %v2179 = vpack.c.b16 %v2149, %v2146
    %v2180 = vpack.c.b16 %v2150, %v2147
    %v2181 = vpack.c.b16 %v2151, %v2148
    %v2182 = vpack.c.b16 %v2155, %v2152
    %v2183 = vpack.c.b16 %v2156, %v2153
    %v2184 = vpack.c.b16 %v2157, %v2154
    %v2185 = vpack.c.b16 %v2161, %v2158
    %v2186 = vpack.c.b16 %v2162, %v2159
    %v2187 = vpack.c.b16 %v2163, %v2160
    %2212 = vmatpush.bf16.msra.mxu0 %v2185
    %2213 = vmatpush.bf16.msra.mxu0 %v2182
    %2214 = vmatpush.bf16.msra.mxu0 %v2179
    %2215 = vmatpush.bf16.msra.mxu0 %v2176
    %2216 = vmatpush.bf16.msra.mxu0 %v2173
    %2217 = vmatpush.bf16.msra.mxu0 %v2170
    %2218 = vmatpush.bf16.msra.mxu0 %v2167
    %2219 = vmatpush.bf16.msra.mxu0 %v2164
    %2220 = vmatmul.bf16.gmra.mxu0 %v2043
    %v2221 = vpop.f32.mrf.mxu0
    %v2222 = vadd.f32 %v2078, %v2221
    %v2223 = vpop.f32.mrf.mxu0
    %2224 = vdwg.mxu0
    %2225 = vmatpush.bf16.msra.mxu0 %v2186
    %2226 = vmatpush.bf16.msra.mxu0 %v2183
    %2227 = vmatpush.bf16.msra.mxu0 %v2180
    %2228 = vmatpush.bf16.msra.mxu0 %v2177
    %2229 = vmatpush.bf16.msra.mxu0 %v2174
    %2230 = vmatpush.bf16.msra.mxu0 %v2171
    %2231 = vmatpush.bf16.msra.mxu0 %v2168
    %2232 = vmatpush.bf16.msra.mxu0 %v2165
    %2233 = vmatmul.bf16.gmra.mxu0 %v2043
    %v2234 = vpop.f32.mrf.mxu0
    %v2235 = vadd.f32 %v2079, %v2234
    %v2236 = vpop.f32.mrf.mxu0
    %2237 = vdwg.mxu0
    %2238 = vmatpush.bf16.msra.mxu0 %v2187
    %2239 = vmatpush.bf16.msra.mxu0 %v2184
    %2240 = vmatpush.bf16.msra.mxu0 %v2181
    %2241 = vmatpush.bf16.msra.mxu0 %v2178
    %2242 = vmatpush.bf16.msra.mxu0 %v2175
    %2243 = vmatpush.bf16.msra.mxu0 %v2172
    %2244 = vmatpush.bf16.msra.mxu0 %v2169
    %2245 = vmatpush.bf16.msra.mxu0 %v2166
    %2246 = vmatmul.bf16.gmra.mxu0 %v2043
    %v2247 = vpop.f32.mrf.mxu0
    %v2248 = vadd.f32 %v2080, %v2247
    %v2249 = vpop.f32.mrf.mxu0
    %2250 = vdwg.mxu0
    %2251 = vst [vmem:[%s6] sm:$0xff] %v2222
    %2252 = vst [vmem:[%s6 + $0x8] sm:$0xff] %v2235
    %2253 = vst [vmem:[%s6 + $0x10] sm:$0xff] %v2248
    // Predicated region
    $region34: #{forward.1} parent=1 // pred_check
      _
    $region35: #{forward.1} parent=1 // pred_check_branch
      %2255 = sbr.rel (0) target = $region37
    $region36: #{forward.1} parent=1 // pred_region
      _
    $region37: #{forward.1} parent=1 // pred_fallthru
      _
    // Predicated region
    $region38: #{forward.1} parent=1 // pred_check
      _
    $region39: #{forward.1} parent=1 // pred_check_branch
      %2257 = sbr.rel (0) target = $region41
    $region40: #{forward.1} parent=1 // pred_region
      _
    $region41: #{forward.1} parent=1 // pred_fallthru
      _
    %2258 = vsyncpa [#allocation3], 1
    %2259 = vsyncpa [#allocation5], 1

</llo_original>
